<compile_context>
chip_gen: v7x
topology: tpu7x:2x2x1
jax: 0.10.0
libtpu: 0.0.40
codegen_flags: <defaults>
</compile_context>

<pallas_src>
import jax
import jax.numpy as jnp
from jax.experimental import pallas as pl
from jax.experimental.pallas import tpu as pltpu

# Model dims (small, TPU friendly): vocab, hidden, topic_size.
V, H, K = 256, 128, 16
PPAD = 128                 # lane-dense packed width for (param1 | param2) output
USE_BF16_MATMUL = True     # bf16 MXU inputs, f32 accumulation (v5e/v6e/v7x safe)


def _softplus(x):
    # numerically stable softplus (f32 VPU/EUP path)
    return jnp.maximum(x, 0.0) + jnp.log1p(jnp.exp(-jnp.abs(x)))


def _exclusive_cumprod_one_minus(z):
    """Exclusive cumulative product of (1 - z) along the last axis.

    ceil(log2(K))-step Hillis-Steele scan built from lane slices/concats,
    replacing the K-deep serial running-product loop (critical path ~K -> ~log2 K).
    """
    b, k = z.shape
    t = 1.0 - z
    # exclusive shift by one: e[0] = 1, e[j] = t[j-1]
    e = jnp.concatenate([jnp.ones((b, 1), z.dtype), t[:, : k - 1]], axis=1)
    d = 1
    while d < k:
        shifted = jnp.concatenate([jnp.ones((b, d), z.dtype), e[:, : k - d]], axis=1)
        e = e * shifted
        d *= 2
    return e


def sbvae_kernel(x_ref, w1_ref, b1_ref, wcat_ref, bcat_ref, eps_ref,
                 wd_ref, bd_ref, recon_ref, params_ref):
    bb = x_ref.shape[0]
    mm_dtype = w1_ref.dtype      # bf16 (or f32) MXU input dtype

    x = x_ref[...].astype(mm_dtype)

    # ---- encoder: Linear -> softplus -> fused (mu | sigma) head (1 matmul) ----
    h = jnp.dot(x, w1_ref[...], preferred_element_type=jnp.float32) + b1_ref[...]
    h = _softplus(h)
    heads = jnp.dot(h.astype(mm_dtype), wcat_ref[...],
                    preferred_element_type=jnp.float32) + bcat_ref[...]
    mu = heads[:, :K]                      # param1 (pre-clamp, as in the reference)
    sg = _softplus(heads[:, K:2 * K])      # param2 (pre-clamp)

    # lane-dense packed (param1 | param2 | zero pad) output -> unmasked stores
    params_ref[...] = jnp.concatenate(
        [mu, sg, jnp.zeros((bb, PPAD - 2 * K), jnp.float32)], axis=1)

    # ---- reparametrize ('Gauss_SBRK') ----
    p1 = jnp.maximum(jnp.float32(1e-4), mu)
    p2 = jnp.maximum(jnp.float32(1e-4), sg)
    z = p1 + jnp.sqrt(p2) * eps_ref[...]
    inv_sum = pl.reciprocal(jnp.sum(z, axis=1, keepdims=True), approx=True)
    z = z * inv_sum                        # reference does not guard a ~0 denominator

    # stick-breaking: pi[:, k] = z[:, k] * prod_{j<k} (1 - z[:, j])
    pi = z * _exclusive_cumprod_one_minus(z)

    # ---- decoder: Linear -> log_softmax (reconstruction is log-probs) ----
    logits = jnp.dot(pi.astype(mm_dtype), wd_ref[...],
                     preferred_element_type=jnp.float32) + bd_ref[...]
    m = jnp.max(logits, axis=1, keepdims=True)
    lse = jnp.log(jnp.sum(jnp.exp(logits - m), axis=1, keepdims=True)) + m
    recon_ref[...] = logits - lse


def stick_breaking_vae_forward(x, params, eps, *, block_b=128):
    """Batch-tiled Pallas forward.  block_b: 128 (v5e) or 256 (v6e/v7x)."""
    w1, b1, wmu, bmu, wsg, bsg, wd, bd = params
    B = x.shape[0]

    mm_dtype = jnp.bfloat16 if USE_BF16_MATMUL else jnp.float32
    # Fuse mu/sigma heads; fold their biases together; cast MXU weights.
    wcat = jnp.concatenate([wmu, wsg], axis=1).astype(mm_dtype)   # (H, 2K)
    bcat = jnp.concatenate([bmu, bsg], axis=1)                    # (1, 2K)
    w1c = w1.astype(mm_dtype)
    wdc = wd.astype(mm_dtype)

    # Batch block: at most block_b rows, rounded up to a multiple of 8 sublanes.
    bb = min(block_b, B)
    bb = ((bb + 7) // 8) * 8
    n_blocks = pl.cdiv(B, bb)
    b_pad = n_blocks * bb
    if b_pad != B:
        x = jnp.pad(x, ((0, b_pad - B), (0, 0)))
        eps = jnp.pad(eps, ((0, b_pad - B), (0, 0)))

    def full_spec(arr):
        n = arr.ndim
        return pl.BlockSpec(arr.shape, lambda i, n=n: (0,) * n)  # VMEM-resident

    in_specs = [
        pl.BlockSpec((bb, V), lambda i: (i, 0)),      # x, batch-tiled
        full_spec(w1c), full_spec(b1),
        full_spec(wcat), full_spec(bcat),
        pl.BlockSpec((bb, K), lambda i: (i, 0)),      # eps, batch-tiled
        full_spec(wdc), full_spec(bd),
    ]
    out_specs = (
        pl.BlockSpec((bb, V), lambda i: (i, 0)),      # recon log-probs
        pl.BlockSpec((bb, PPAD), lambda i: (i, 0)),   # packed (param1 | param2)
    )
    out_shape = (
        jax.ShapeDtypeStruct((b_pad, V), jnp.float32),
        jax.ShapeDtypeStruct((b_pad, PPAD), jnp.float32),
    )

    recon, packed = pl.pallas_call(
        sbvae_kernel,
        out_shape=out_shape,
        grid=(n_blocks,),
        in_specs=in_specs,
        out_specs=out_specs,
        compiler_params=pltpu.CompilerParams(
            dimension_semantics=("parallel",),        # shards across TCs on v7x
            vmem_limit_bytes=64 * 1024 * 1024,
        ),
    )(x, w1c, b1, wcat, bcat, eps, wdc, bd)

    recon_x = recon[:B]
    param1 = packed[:B, :K]
    param2 = packed[:B, K:2 * K]
    return recon_x, param1, param2


def init_params(key):
    ks = jax.random.split(key, 4)
    scale = 0.05
    w1 = scale * jax.random.normal(ks[0], (V, H), jnp.float32)
    b1 = jnp.zeros((1, H), jnp.float32)
    wmu = scale * jax.random.normal(ks[1], (H, K), jnp.float32)
    bmu = jnp.zeros((1, K), jnp.float32)
    wsg = scale * jax.random.normal(ks[2], (H, K), jnp.float32)
    bsg = jnp.zeros((1, K), jnp.float32)
    wd = scale * jax.random.normal(ks[3], (K, V), jnp.float32)
    bd = jnp.zeros((1, V), jnp.float32)
    return (w1, b1, wmu, bmu, wsg, bsg, wd, bd)


if __name__ == "__main__":
    key = jax.random.PRNGKey(0)
    k_x, k_eps, k_p = jax.random.split(key, 3)

    B = 256  # two grid steps at block_b=128 (exercises the batch pipeline)
    # bag-of-words style non-negative input; eps passed in for determinism
    x = jax.random.uniform(k_x, (B, V), jnp.float32, minval=0.0, maxval=3.0)
    eps = jax.random.normal(k_eps, (B, K), jnp.float32)
    params = init_params(k_p)

    recon_x, param1, param2 = stick_breaking_vae_forward(x, params, eps, block_b=128)
    jax.block_until_ready((recon_x, param1, param2))

    assert recon_x.shape == (B, V) and param1.shape == (B, K) and param2.shape == (B, K)
    assert bool(jnp.all(jnp.isfinite(param1))) and bool(jnp.all(jnp.isfinite(param2)))
    print("KERNEL_OK")
</pallas_src>

<mosaic_0001>
module attributes {stable_mosaic.version = 11 : i64} {
  func.func @sbvae_kernel(%arg0: i32, %arg1: memref<128x256xf32, #tpu.memory_space<vmem>>, %arg2: memref<256x128xbf16, #tpu.memory_space<vmem>>, %arg3: memref<1x128xf32, #tpu.memory_space<vmem>>, %arg4: memref<128x32xbf16, #tpu.memory_space<vmem>>, %arg5: memref<1x32xf32, #tpu.memory_space<vmem>>, %arg6: memref<128x16xf32, #tpu.memory_space<vmem>>, %arg7: memref<16x256xbf16, #tpu.memory_space<vmem>>, %arg8: memref<1x256xf32, #tpu.memory_space<vmem>>, %arg9: memref<128x256xf32, #tpu.memory_space<vmem>>, %arg10: memref<128x128xf32, #tpu.memory_space<vmem>>) attributes {dimension_semantics = [#tpu.dimension_semantics<parallel>], iteration_bounds = array<i64: 2>, scalar_prefetch = 0 : i64, scratch_operands = 0 : i64, tpu.core_type = #tpu.core_type<tc>, window_params = [{transform_indices = @transform_0, window_bounds = array<i64: 128, 256>}, {pipeline_mode = #tpu.pipeline_mode<synchronous>, transform_indices = @transform_1, window_bounds = array<i64: 256, 128>}, {pipeline_mode = #tpu.pipeline_mode<synchronous>, transform_indices = @transform_2, window_bounds = array<i64: 1, 128>}, {pipeline_mode = #tpu.pipeline_mode<synchronous>, transform_indices = @transform_3, window_bounds = array<i64: 128, 32>}, {pipeline_mode = #tpu.pipeline_mode<synchronous>, transform_indices = @transform_4, window_bounds = array<i64: 1, 32>}, {transform_indices = @transform_5, window_bounds = array<i64: 128, 16>}, {pipeline_mode = #tpu.pipeline_mode<synchronous>, transform_indices = @transform_6, window_bounds = array<i64: 16, 256>}, {pipeline_mode = #tpu.pipeline_mode<synchronous>, transform_indices = @transform_7, window_bounds = array<i64: 1, 256>}, {transform_indices = @transform_8, window_bounds = array<i64: 128, 256>}, {transform_indices = @transform_9, window_bounds = array<i64: 128, 128>}]} {
    %c0 = arith.constant 0 : index
    %c0_0 = arith.constant 0 : index
    %0 = vector.load %arg1[%c0, %c0_0] : memref<128x256xf32, #tpu.memory_space<vmem>>, vector<128x256xf32>
    %1 = arith.truncf %0 : vector<128x256xf32> to vector<128x256xbf16>
    %c0_1 = arith.constant 0 : index
    %c0_2 = arith.constant 0 : index
    %2 = vector.load %arg2[%c0_1, %c0_2] : memref<256x128xbf16, #tpu.memory_space<vmem>>, vector<256x128xbf16>
    %cst = arith.constant dense<0.000000e+00> : vector<128x128xf32>
    %3 = tpu.matmul %1, %2, %cst {dimension_numbers = #tpu.dot_dimension_numbers<[1], [0], [0], [1], [0, 0, 1, 1], [], []>} : vector<128x256xbf16>, vector<256x128xbf16>, vector<128x128xf32> -> vector<128x128xf32>
    %c0_3 = arith.constant 0 : index
    %c0_4 = arith.constant 0 : index
    %4 = vector.load %arg3[%c0_3, %c0_4] : memref<1x128xf32, #tpu.memory_space<vmem>>, vector<1x128xf32>
    %5 = vector.broadcast %4 : vector<1x128xf32> to vector<128x128xf32>
    %6 = arith.addf %3, %5 : vector<128x128xf32>
    %cst_5 = arith.constant 0.000000e+00 : f32
    %7 = vector.broadcast %cst_5 : f32 to vector<128x128xf32>
    %8 = arith.maximumf %6, %7 : vector<128x128xf32>
    %9 = math.absf %6 : vector<128x128xf32>
    %cst_6 = arith.constant 0.000000e+00 : f32
    %10 = vector.broadcast %cst_6 : f32 to vector<128x128xf32>
    %11 = arith.subf %10, %9 : vector<128x128xf32>
    %12 = math.exp %11 : vector<128x128xf32>
    %13 = math.log1p %12 : vector<128x128xf32>
    %14 = arith.addf %8, %13 : vector<128x128xf32>
    %15 = arith.truncf %14 : vector<128x128xf32> to vector<128x128xbf16>
    %c0_7 = arith.constant 0 : index
    %c0_8 = arith.constant 0 : index
    %16 = vector.load %arg4[%c0_7, %c0_8] : memref<128x32xbf16, #tpu.memory_space<vmem>>, vector<128x32xbf16>
    %cst_9 = arith.constant dense<0.000000e+00> : vector<128x32xf32>
    %17 = tpu.matmul %15, %16, %cst_9 {dimension_numbers = #tpu.dot_dimension_numbers<[1], [0], [0], [1], [0, 0, 1, 1], [], []>} : vector<128x128xbf16>, vector<128x32xbf16>, vector<128x32xf32> -> vector<128x32xf32>
    %c0_10 = arith.constant 0 : index
    %c0_11 = arith.constant 0 : index
    %18 = vector.load %arg5[%c0_10, %c0_11] : memref<1x32xf32, #tpu.memory_space<vmem>>, vector<1x32xf32>
    %19 = vector.broadcast %18 : vector<1x32xf32> to vector<128x32xf32>
    %20 = arith.addf %17, %19 : vector<128x32xf32>
    %21 = vector.extract_strided_slice %20 {offsets = [0, 0], sizes = [128, 16], strides = [1, 1]} : vector<128x32xf32> to vector<128x16xf32>
    %22 = vector.extract_strided_slice %20 {offsets = [0, 16], sizes = [128, 16], strides = [1, 1]} : vector<128x32xf32> to vector<128x16xf32>
    %cst_12 = arith.constant 0.000000e+00 : f32
    %23 = vector.broadcast %cst_12 : f32 to vector<128x16xf32>
    %24 = arith.maximumf %22, %23 : vector<128x16xf32>
    %25 = math.absf %22 : vector<128x16xf32>
    %cst_13 = arith.constant 0.000000e+00 : f32
    %26 = vector.broadcast %cst_13 : f32 to vector<128x16xf32>
    %27 = arith.subf %26, %25 : vector<128x16xf32>
    %28 = math.exp %27 : vector<128x16xf32>
    %29 = math.log1p %28 : vector<128x16xf32>
    %30 = arith.addf %24, %29 : vector<128x16xf32>
    %cst_14 = arith.constant 0.000000e+00 : f32
    %31 = vector.broadcast %cst_14 : f32 to vector<128x96xf32>
    %32 = tpu.concatenate %21, %30, %31 in 1 : vector<128x16xf32>, vector<128x16xf32>, vector<128x96xf32> -> vector<128x128xf32>
    %c0_15 = arith.constant 0 : index
    %c0_16 = arith.constant 0 : index
    %33 = vector.load %arg10[%c0_15, %c0_16] : memref<128x128xf32, #tpu.memory_space<vmem>>, vector<128x128xf32>
    tpu.vector_store %arg10[%c0_15, %c0_16], %32 {strides = array<i32>} : memref<128x128xf32, #tpu.memory_space<vmem>>, vector<128x128xf32>,
    %cst_17 = arith.constant 9.99999974E-5 : f32
    %34 = vector.broadcast %cst_17 : f32 to vector<128x16xf32>
    %35 = arith.maximumf %34, %21 : vector<128x16xf32>
    %cst_18 = arith.constant 9.99999974E-5 : f32
    %36 = vector.broadcast %cst_18 : f32 to vector<128x16xf32>
    %37 = arith.maximumf %36, %30 : vector<128x16xf32>
    %38 = math.sqrt %37 : vector<128x16xf32>
    %c0_19 = arith.constant 0 : index
    %c0_20 = arith.constant 0 : index
    %39 = vector.load %arg6[%c0_19, %c0_20] : memref<128x16xf32, #tpu.memory_space<vmem>>, vector<128x16xf32>
    %40 = arith.mulf %38, %39 : vector<128x16xf32>
    %41 = arith.addf %35, %40 : vector<128x16xf32>
    %cst_21 = arith.constant dense<0.000000e+00> : vector<128xf32>
    %42 = vector.multi_reduction <add>, %41, %cst_21 [1] : vector<128x16xf32> to vector<128xf32>
    %43 = vector.shape_cast %42 : vector<128xf32> to vector<128x1xf32>
    %44 = tpu.reciprocal %43 {approx = true} : vector<128x1xf32> -> vector<128x1xf32>
    %45 = vector.broadcast %44 : vector<128x1xf32> to vector<128x16xf32>
    %46 = arith.mulf %41, %45 : vector<128x16xf32>
    %cst_22 = arith.constant 1.000000e+00 : f32
    %47 = vector.broadcast %cst_22 : f32 to vector<128x16xf32>
    %48 = arith.subf %47, %46 : vector<128x16xf32>
    %cst_23 = arith.constant 1.000000e+00 : f32
    %49 = vector.broadcast %cst_23 : f32 to vector<128x1xf32>
    %50 = vector.extract_strided_slice %48 {offsets = [0, 0], sizes = [128, 15], strides = [1, 1]} : vector<128x16xf32> to vector<128x15xf32>
    %51 = tpu.concatenate %49, %50 in 1 : vector<128x1xf32>, vector<128x15xf32> -> vector<128x16xf32>
    %cst_24 = arith.constant 1.000000e+00 : f32
    %52 = vector.broadcast %cst_24 : f32 to vector<128x1xf32>
    %53 = vector.extract_strided_slice %51 {offsets = [0, 0], sizes = [128, 15], strides = [1, 1]} : vector<128x16xf32> to vector<128x15xf32>
    %54 = tpu.concatenate %52, %53 in 1 : vector<128x1xf32>, vector<128x15xf32> -> vector<128x16xf32>
    %55 = arith.mulf %51, %54 : vector<128x16xf32>
    %cst_25 = arith.constant 1.000000e+00 : f32
    %56 = vector.broadcast %cst_25 : f32 to vector<128x2xf32>
    %57 = vector.extract_strided_slice %55 {offsets = [0, 0], sizes = [128, 14], strides = [1, 1]} : vector<128x16xf32> to vector<128x14xf32>
    %58 = tpu.concatenate %56, %57 in 1 : vector<128x2xf32>, vector<128x14xf32> -> vector<128x16xf32>
    %59 = arith.mulf %55, %58 : vector<128x16xf32>
    %cst_26 = arith.constant 1.000000e+00 : f32
    %60 = vector.broadcast %cst_26 : f32 to vector<128x4xf32>
    %61 = vector.extract_strided_slice %59 {offsets = [0, 0], sizes = [128, 12], strides = [1, 1]} : vector<128x16xf32> to vector<128x12xf32>
    %62 = tpu.concatenate %60, %61 in 1 : vector<128x4xf32>, vector<128x12xf32> -> vector<128x16xf32>
    %63 = arith.mulf %59, %62 : vector<128x16xf32>
    %cst_27 = arith.constant 1.000000e+00 : f32
    %64 = vector.broadcast %cst_27 : f32 to vector<128x8xf32>
    %65 = vector.extract_strided_slice %63 {offsets = [0, 0], sizes = [128, 8], strides = [1, 1]} : vector<128x16xf32> to vector<128x8xf32>
    %66 = tpu.concatenate %64, %65 in 1 : vector<128x8xf32>, vector<128x8xf32> -> vector<128x16xf32>
    %67 = arith.mulf %63, %66 : vector<128x16xf32>
    %68 = arith.mulf %46, %67 : vector<128x16xf32>
    %69 = arith.truncf %68 : vector<128x16xf32> to vector<128x16xbf16>
    %c0_28 = arith.constant 0 : index
    %c0_29 = arith.constant 0 : index
    %70 = vector.load %arg7[%c0_28, %c0_29] : memref<16x256xbf16, #tpu.memory_space<vmem>>, vector<16x256xbf16>
    %cst_30 = arith.constant dense<0.000000e+00> : vector<128x256xf32>
    %71 = tpu.matmul %69, %70, %cst_30 {dimension_numbers = #tpu.dot_dimension_numbers<[1], [0], [0], [1], [0, 0, 1, 1], [], []>} : vector<128x16xbf16>, vector<16x256xbf16>, vector<128x256xf32> -> vector<128x256xf32>
    %c0_31 = arith.constant 0 : index
    %c0_32 = arith.constant 0 : index
    %72 = vector.load %arg8[%c0_31, %c0_32] : memref<1x256xf32, #tpu.memory_space<vmem>>, vector<1x256xf32>
    %73 = vector.broadcast %72 : vector<1x256xf32> to vector<128x256xf32>
    %74 = arith.addf %71, %73 : vector<128x256xf32>
    %cst_33 = arith.constant dense<0xFF800000> : vector<128xf32>
    %75 = vector.multi_reduction <maximumf>, %74, %cst_33 [1] : vector<128x256xf32> to vector<128xf32>
    %76 = vector.shape_cast %75 : vector<128xf32> to vector<128x1xf32>
    %77 = vector.broadcast %76 : vector<128x1xf32> to vector<128x256xf32>
    %78 = arith.subf %74, %77 : vector<128x256xf32>
    %79 = math.exp %78 : vector<128x256xf32>
    %cst_34 = arith.constant dense<0.000000e+00> : vector<128xf32>
    %80 = vector.multi_reduction <add>, %79, %cst_34 [1] : vector<128x256xf32> to vector<128xf32>
    %81 = vector.shape_cast %80 : vector<128xf32> to vector<128x1xf32>
    %82 = math.log %81 : vector<128x1xf32>
    %83 = arith.addf %82, %76 : vector<128x1xf32>
    %84 = vector.broadcast %83 : vector<128x1xf32> to vector<128x256xf32>
    %85 = arith.subf %74, %84 : vector<128x256xf32>
    %c0_35 = arith.constant 0 : index
    %c0_36 = arith.constant 0 : index
    %86 = vector.load %arg9[%c0_35, %c0_36] : memref<128x256xf32, #tpu.memory_space<vmem>>, vector<128x256xf32>
    tpu.vector_store %arg9[%c0_35, %c0_36], %85 {strides = array<i32>} : memref<128x256xf32, #tpu.memory_space<vmem>>, vector<128x256xf32>,
    return
  }
  func.func @transform_0(%arg0: i32) -> (i32, i32) {
    %c0_i32 = arith.constant 0 : i32
    %c0_i32_0 = arith.constant 0 : i32
    return %arg0, %c0_i32 : i32, i32
  }
  func.func @transform_1(%arg0: i32) -> (i32, i32) {
    %c0_i32 = arith.constant 0 : i32
    %c0_i32_0 = arith.constant 0 : i32
    %c0_i32_1 = arith.constant 0 : i32
    return %c0_i32, %c0_i32_0 : i32, i32
  }
  func.func @transform_2(%arg0: i32) -> (i32, i32) {
    %c0_i32 = arith.constant 0 : i32
    %c0_i32_0 = arith.constant 0 : i32
    %c0_i32_1 = arith.constant 0 : i32
    return %c0_i32, %c0_i32_0 : i32, i32
  }
  func.func @transform_3(%arg0: i32) -> (i32, i32) {
    %c0_i32 = arith.constant 0 : i32
    %c0_i32_0 = arith.constant 0 : i32
    %c0_i32_1 = arith.constant 0 : i32
    return %c0_i32, %c0_i32_0 : i32, i32
  }
  func.func @transform_4(%arg0: i32) -> (i32, i32) {
    %c0_i32 = arith.constant 0 : i32
    %c0_i32_0 = arith.constant 0 : i32
    %c0_i32_1 = arith.constant 0 : i32
    return %c0_i32, %c0_i32_0 : i32, i32
  }
  func.func @transform_5(%arg0: i32) -> (i32, i32) {
    %c0_i32 = arith.constant 0 : i32
    %c0_i32_0 = arith.constant 0 : i32
    return %arg0, %c0_i32 : i32, i32
  }
  func.func @transform_6(%arg0: i32) -> (i32, i32) {
    %c0_i32 = arith.constant 0 : i32
    %c0_i32_0 = arith.constant 0 : i32
    %c0_i32_1 = arith.constant 0 : i32
    return %c0_i32, %c0_i32_0 : i32, i32
  }
  func.func @transform_7(%arg0: i32) -> (i32, i32) {
    %c0_i32 = arith.constant 0 : i32
    %c0_i32_0 = arith.constant 0 : i32
    %c0_i32_1 = arith.constant 0 : i32
    return %c0_i32, %c0_i32_0 : i32, i32
  }
  func.func @transform_8(%arg0: i32) -> (i32, i32) {
    %c0_i32 = arith.constant 0 : i32
    %c0_i32_0 = arith.constant 0 : i32
    return %arg0, %c0_i32 : i32, i32
  }
  func.func @transform_9(%arg0: i32) -> (i32, i32) {
    %c0_i32 = arith.constant 0 : i32
    %c0_i32_0 = arith.constant 0 : i32
    return %arg0, %c0_i32 : i32, i32
  }
}

</mosaic_0001>

<llo_original>
// kernel: tpu_custom_call.1
$region0: #{tpu_custom_call.1}
  #allocation0 [shape = 'u32[]', space=smem, size = 0x4, offset = 0x4, fixed_abs, tag = 'smem constant byte address 0x4 - core index']
  #allocation1 [shape = 'u32[144,128]{1,0:T(1,128)}', space=vmem, size = 0x12000, scoped, tag = 'internal scratch']
  %s0 = inlined_call_operand.hbm [shape: f32[256,256], index: 0, kind: input, shape index: {}]
  %s1 = inlined_call_operand.hbm [shape: bf16[256,128], index: 1, kind: input, shape index: {}]
  %s2 = inlined_call_operand.hbm [shape: f32[1,128], index: 2, kind: input, shape index: {}]
  %s3 = inlined_call_operand.hbm [shape: bf16[128,32], index: 3, kind: input, shape index: {}]
  %s4 = inlined_call_operand.hbm [shape: f32[1,32], index: 4, kind: input, shape index: {}]
  %s5 = inlined_call_operand.hbm [shape: f32[256,16], index: 5, kind: input, shape index: {}]
  %s6 = inlined_call_operand.hbm [shape: bf16[16,256], index: 6, kind: input, shape index: {}]
  %s7 = inlined_call_operand.hbm [shape: f32[1,256], index: 7, kind: input, shape index: {}]
  %s8 = inlined_call_operand.hbm [shape: f32[256,256], index: 8, kind: output, shape index: {0}]
  %s9 = inlined_call_operand.hbm [shape: f32[256,128], index: 9, kind: output, shape index: {1}]
  %10 = xla_tuple %s8, %s9
  %s11 = sld [smem:[#allocation0]]
  $region105: #{tpu_custom_call.1} parent=0
    _
  %s13 = ssub.s32 1, %s11
  %s14 = scalar_select 0, %s13, %s11
  $region1: #{tpu_custom_call.1} parent=0
    #allocation2 [shape = 'u8[262144]{0}', space=vmem, size = 0x40000, scoped, tag = 'input window, operand 0']
    #allocation3 [shape = 's32[2]{0}', space=sflag, size = 0x8, scoped, tag = 'scoped memory for tpu_custom_call.1']
    #allocation4 [shape = 's32[2]{0}', space=sflag, size = 0x8, scoped, tag = 'scoped memory for tpu_custom_call.1']
    #allocation5 [shape = 'u8[65536]{0}', space=vmem, size = 0x10000, scoped, tag = 'input window, operand 1, single buffered']
    #allocation6 [shape = 's32[1]{0}', space=sflag, size = 0x4, scoped, tag = 'scoped memory for tpu_custom_call.1']
    #allocation7 [shape = 'u8[512]{0}', space=vmem, size = 0x400, scoped, tag = 'input window, operand 2, single buffered']
    #allocation8 [shape = 'u8[32768]{0}', space=vmem, size = 0x8000, scoped, tag = 'input window, operand 3, single buffered']
    #allocation9 [shape = 's32[1]{0}', space=sflag, size = 0x4, scoped, tag = 'scoped memory for tpu_custom_call.1']
    #allocation10 [shape = 'u8[512]{0}', space=vmem, size = 0x400, scoped, tag = 'input window, operand 4, single buffered']
    #allocation11 [shape = 'u8[131072]{0}', space=vmem, size = 0x20000, scoped, tag = 'input window, operand 5']
    #allocation12 [shape = 's32[2]{0}', space=sflag, size = 0x8, scoped, tag = 'scoped memory for tpu_custom_call.1']
    #allocation13 [shape = 'u8[8192]{0}', space=vmem, size = 0x2000, scoped, tag = 'input window, operand 6, single buffered']
    #allocation14 [shape = 'u8[1024]{0}', space=vmem, size = 0x400, scoped, tag = 'input window, operand 7, single buffered']
    #allocation15 [shape = 's32[1]{0}', space=sflag, size = 0x4, scoped, tag = 'scoped memory for tpu_custom_call.1']
    #allocation16 [shape = 'u8[262144]{0}', space=vmem, size = 0x40000, scoped, tag = 'output window, operand 0']
    #allocation17 [shape = 'u8[131072]{0}', space=vmem, size = 0x20000, scoped, tag = 'output window, operand 1']
    #allocation18 [shape = 's32[2]{0}', space=sflag, size = 0x8, scoped, tag = 'scoped memory for tpu_custom_call.1']
    %15 = vsyncpa [#allocation3], 0
    %s16 = scalar_lea.sflag [#allocation3], 1
    %17 = vsyncpa %s16, 0
    %18 = vsyncpa [#allocation6], 0
    %19 = vsyncpa [#allocation9], 0
    %20 = vsyncpa [#allocation12], 0
    %s21 = scalar_lea.sflag [#allocation12], 1
    %22 = vsyncpa %s21, 0
    %23 = vsyncpa [#allocation15], 0
    %24 = vsyncpa [#allocation4], 0
    %s25 = scalar_lea.sflag [#allocation4], 1
    %26 = vsyncpa %s25, 0
    %27 = vsyncpa [#allocation18], 0
    %s28 = scalar_lea.sflag [#allocation18], 1
    %29 = vsyncpa %s28, 0
    loop: start=0, step=1, limit=4
    $region2: #{tpu_custom_call.1} parent=1 // loop_pre_header
      _
    $region3: #{tpu_custom_call.1} parent=1 // loop_header
      %s31 = sphi 0, %s35
      %p32 = scmp.ge.s32.totalorder %s31, 4
      %s41 = sphi 0, %s43
      %s44 = sphi 0, %s41
      %s45 = sphi 0, %s44
      %s61 = sphi 0, %s45
      %s65 = sphi 0, %s65
      %s67 = sphi 0, %s65
      %s68 = sphi 0, %s67
      %s82 = sphi 0, %s68
      %s86 = sphi 0, %s86
      %s88 = sphi 0, %s86
      %s89 = sphi 0, %s88
      %s103 = sphi 0, %s89
      %s107 = sphi 0, %s107
      %s109 = sphi 0, %s107
      %s110 = sphi 0, %s109
      %s124 = sphi 0, %s110
      %s128 = sphi 0, %s128
      %s130 = sphi 0, %s128
      %s131 = sphi 0, %s130
      %s145 = sphi 0, %s131
      %s151 = sphi 0, %s153
      %s154 = sphi 0, %s151
      %s155 = sphi 0, %s154
      %s171 = sphi 0, %s155
      %s175 = sphi 0, %s175
      %s177 = sphi 0, %s175
      %s178 = sphi 0, %s177
      %s192 = sphi 0, %s178
      %s196 = sphi 0, %s196
      %s198 = sphi 0, %s196
      %s199 = sphi 0, %s198
      %s213 = sphi 0, %s199
      %s219 = sphi 0, %s221
      %s222 = sphi 0, %s219
      %s223 = sphi 0, %s222
      %s239 = sphi 0, %s223
      %s245 = sphi 0, %s247
      %s248 = sphi 0, %s245
      %s249 = sphi 0, %s248
      %s265 = sphi 0, %s249
    $region4: #{tpu_custom_call.1} parent=1 // loop_header_branch
      %34 = sbr.rel (%p32) target = $region8
    $region5: #{tpu_custom_call.1} parent=1 // loop_body
      %s36 = ssub.s32 %s31, 1
      %s37 = ssub.s32 %s31, 2
      %s38 = sadd.s32 %s31, 1
      %s39 = ssub.s32 %s31, %s38
      %p40 = scmp.eq.s32.totalorder %s39, 0
      %s42 = sadd.s32 %s41, 1
      %s43 = scalar_select %p40, %s41, %s42
      %p46 = pneg %p40
      %p47 = scmp.eq.s32.totalorder %s31, 1
      %p48 = por %p46, %p47
      %p49 = scmp.ne.s32.totalorder %s41, %s44
      %p50 = scmp.eq.s32.totalorder %s31, 0
      %p51 = por %p49, %p50
      %p52 = scmp.ne.s32.totalorder %s41, %s44
      %p53 = scmp.eq.s32.totalorder %s36, 1
      %p54 = por %p52, %p53
      %p55 = scmp.ne.s32.totalorder %s44, %s45
      %p56 = scmp.eq.s32.totalorder %s36, 0
      %p57 = por %p55, %p56
      %p58 = scmp.ne.s32.totalorder %s44, %s45
      %p59 = scmp.eq.s32.totalorder %s37, 1
      %p60 = por %p58, %p59
      %p62 = scmp.ne.s32.totalorder %s45, %s61
      %p63 = scmp.eq.s32.totalorder %s37, 0
      %p64 = por %p62, %p63
      %s66 = sadd.s32 %s65, 1
      %p69 = scmp.eq.s32.totalorder %s31, 1
      %p70 = scmp.ne.s32.totalorder %s65, %s67
      %p71 = scmp.eq.s32.totalorder %s31, 0
      %p72 = por %p70, %p71
      %p73 = scmp.ne.s32.totalorder %s65, %s67
      %p74 = scmp.eq.s32.totalorder %s36, 1
      %p75 = por %p73, %p74
      %p76 = scmp.ne.s32.totalorder %s67, %s68
      %p77 = scmp.eq.s32.totalorder %s36, 0
      %p78 = por %p76, %p77
      %p79 = scmp.ne.s32.totalorder %s67, %s68
      %p80 = scmp.eq.s32.totalorder %s37, 1
      %p81 = por %p79, %p80
      %p83 = scmp.ne.s32.totalorder %s68, %s82
      %p84 = scmp.eq.s32.totalorder %s37, 0
      %p85 = por %p83, %p84
      %s87 = sadd.s32 %s86, 1
      %p90 = scmp.eq.s32.totalorder %s31, 1
      %p91 = scmp.ne.s32.totalorder %s86, %s88
      %p92 = scmp.eq.s32.totalorder %s31, 0
      %p93 = por %p91, %p92
      %p94 = scmp.ne.s32.totalorder %s86, %s88
      %p95 = scmp.eq.s32.totalorder %s36, 1
      %p96 = por %p94, %p95
      %p97 = scmp.ne.s32.totalorder %s88, %s89
      %p98 = scmp.eq.s32.totalorder %s36, 0
      %p99 = por %p97, %p98
      %p100 = scmp.ne.s32.totalorder %s88, %s89
      %p101 = scmp.eq.s32.totalorder %s37, 1
      %p102 = por %p100, %p101
      %p104 = scmp.ne.s32.totalorder %s89, %s103
      %p105 = scmp.eq.s32.totalorder %s37, 0
      %p106 = por %p104, %p105
      %s108 = sadd.s32 %s107, 1
      %p111 = scmp.eq.s32.totalorder %s31, 1
      %p112 = scmp.ne.s32.totalorder %s107, %s109
      %p113 = scmp.eq.s32.totalorder %s31, 0
      %p114 = por %p112, %p113
      %p115 = scmp.ne.s32.totalorder %s107, %s109
      %p116 = scmp.eq.s32.totalorder %s36, 1
      %p117 = por %p115, %p116
      %p118 = scmp.ne.s32.totalorder %s109, %s110
      %p119 = scmp.eq.s32.totalorder %s36, 0
      %p120 = por %p118, %p119
      %p121 = scmp.ne.s32.totalorder %s109, %s110
      %p122 = scmp.eq.s32.totalorder %s37, 1
      %p123 = por %p121, %p122
      %p125 = scmp.ne.s32.totalorder %s110, %s124
      %p126 = scmp.eq.s32.totalorder %s37, 0
      %p127 = por %p125, %p126
      %s129 = sadd.s32 %s128, 1
      %p132 = scmp.eq.s32.totalorder %s31, 1
      %p133 = scmp.ne.s32.totalorder %s128, %s130
      %p134 = scmp.eq.s32.totalorder %s31, 0
      %p135 = por %p133, %p134
      %p136 = scmp.ne.s32.totalorder %s128, %s130
      %p137 = scmp.eq.s32.totalorder %s36, 1
      %p138 = por %p136, %p137
      %p139 = scmp.ne.s32.totalorder %s130, %s131
      %p140 = scmp.eq.s32.totalorder %s36, 0
      %p141 = por %p139, %p140
      %p142 = scmp.ne.s32.totalorder %s130, %s131
      %p143 = scmp.eq.s32.totalorder %s37, 1
      %p144 = por %p142, %p143
      %p146 = scmp.ne.s32.totalorder %s131, %s145
      %p147 = scmp.eq.s32.totalorder %s37, 0
      %p148 = por %p146, %p147
      %s149 = ssub.s32 %s31, %s38
      %p150 = scmp.eq.s32.totalorder %s149, 0
      %s152 = sadd.s32 %s151, 1
      %s153 = scalar_select %p150, %s151, %s152
      %p156 = pneg %p150
      %p157 = scmp.eq.s32.totalorder %s31, 1
      %p158 = por %p156, %p157
      %p159 = scmp.ne.s32.totalorder %s151, %s154
      %p160 = scmp.eq.s32.totalorder %s31, 0
      %p161 = por %p159, %p160
      %p162 = scmp.ne.s32.totalorder %s151, %s154
      %p163 = scmp.eq.s32.totalorder %s36, 1
      %p164 = por %p162, %p163
      %p165 = scmp.ne.s32.totalorder %s154, %s155
      %p166 = scmp.eq.s32.totalorder %s36, 0
      %p167 = por %p165, %p166
      %p168 = scmp.ne.s32.totalorder %s154, %s155
      %p169 = scmp.eq.s32.totalorder %s37, 1
      %p170 = por %p168, %p169
      %p172 = scmp.ne.s32.totalorder %s155, %s171
      %p173 = scmp.eq.s32.totalorder %s37, 0
      %p174 = por %p172, %p173
      %s176 = sadd.s32 %s175, 1
      %p179 = scmp.eq.s32.totalorder %s31, 1
      %p180 = scmp.ne.s32.totalorder %s175, %s177
      %p181 = scmp.eq.s32.totalorder %s31, 0
      %p182 = por %p180, %p181
      %p183 = scmp.ne.s32.totalorder %s175, %s177
      %p184 = scmp.eq.s32.totalorder %s36, 1
      %p185 = por %p183, %p184
      %p186 = scmp.ne.s32.totalorder %s177, %s178
      %p187 = scmp.eq.s32.totalorder %s36, 0
      %p188 = por %p186, %p187
      %p189 = scmp.ne.s32.totalorder %s177, %s178
      %p190 = scmp.eq.s32.totalorder %s37, 1
      %p191 = por %p189, %p190
      %p193 = scmp.ne.s32.totalorder %s178, %s192
      %p194 = scmp.eq.s32.totalorder %s37, 0
      %p195 = por %p193, %p194
      %s197 = sadd.s32 %s196, 1
      %p200 = scmp.eq.s32.totalorder %s31, 1
      %p201 = scmp.ne.s32.totalorder %s196, %s198
      %p202 = scmp.eq.s32.totalorder %s31, 0
      %p203 = por %p201, %p202
      %p204 = scmp.ne.s32.totalorder %s196, %s198
      %p205 = scmp.eq.s32.totalorder %s36, 1
      %p206 = por %p204, %p205
      %p207 = scmp.ne.s32.totalorder %s198, %s199
      %p208 = scmp.eq.s32.totalorder %s36, 0
      %p209 = por %p207, %p208
      %p210 = scmp.ne.s32.totalorder %s198, %s199
      %p211 = scmp.eq.s32.totalorder %s37, 1
      %p212 = por %p210, %p211
      %p214 = scmp.ne.s32.totalorder %s199, %s213
      %p215 = scmp.eq.s32.totalorder %s37, 0
      %p216 = por %p214, %p215
      %s217 = ssub.s32 %s31, %s38
      %p218 = scmp.eq.s32.totalorder %s217, 0
      %s220 = sadd.s32 %s219, 1
      %s221 = scalar_select %p218, %s219, %s220
      %p224 = pneg %p218
      %p225 = scmp.eq.s32.totalorder %s31, 1
      %p226 = por %p224, %p225
      %p227 = scmp.ne.s32.totalorder %s219, %s222
      %p228 = scmp.eq.s32.totalorder %s31, 0
      %p229 = por %p227, %p228
      %p230 = scmp.ne.s32.totalorder %s219, %s222
      %p231 = scmp.eq.s32.totalorder %s36, 1
      %p232 = por %p230, %p231
      %p233 = scmp.ne.s32.totalorder %s222, %s223
      %p234 = scmp.eq.s32.totalorder %s36, 0
      %p235 = por %p233, %p234
      %p236 = scmp.ne.s32.totalorder %s222, %s223
      %p237 = scmp.eq.s32.totalorder %s37, 1
      %p238 = por %p236, %p237
      %p240 = scmp.ne.s32.totalorder %s223, %s239
      %p241 = scmp.eq.s32.totalorder %s37, 0
      %p242 = por %p240, %p241
      %s243 = ssub.s32 %s31, %s38
      %p244 = scmp.eq.s32.totalorder %s243, 0
      %s246 = sadd.s32 %s245, 1
      %s247 = scalar_select %p244, %s245, %s246
      %p250 = pneg %p244
      %p251 = scmp.eq.s32.totalorder %s31, 1
      %p252 = por %p250, %p251
      %p253 = scmp.ne.s32.totalorder %s245, %s248
      %p254 = scmp.eq.s32.totalorder %s31, 0
      %p255 = por %p253, %p254
      %p256 = scmp.ne.s32.totalorder %s245, %s248
      %p257 = scmp.eq.s32.totalorder %s36, 1
      %p258 = por %p256, %p257
      %p259 = scmp.ne.s32.totalorder %s248, %s249
      %p260 = scmp.eq.s32.totalorder %s36, 0
      %p261 = por %p259, %p260
      %p262 = scmp.ne.s32.totalorder %s248, %s249
      %p263 = scmp.eq.s32.totalorder %s37, 1
      %p264 = por %p262, %p263
      %p266 = scmp.ne.s32.totalorder %s249, %s265
      %p267 = scmp.eq.s32.totalorder %s37, 0
      %p268 = por %p266, %p267
      %p269 = scmp.le.s32.totalorder 1, %s31
      %p270 = scmp.lt.s32.totalorder %s31, 3
      %p271 = pnand %p269, %p270
      %p272 = pneg %p271
      // Predicated region
      $region9: #{tpu_custom_call.1} parent=5 // pred_check
        _
      $region10: #{tpu_custom_call.1} parent=5 // pred_check_branch
        %274 = sbr.rel (%p271) target = $region12
      $region11: #{tpu_custom_call.1} parent=5 // pred_region
        %s275 = ssub.s32 %s31, 1
        // Predicated region
        $region13: #{tpu_custom_call.1} parent=11 // pred_check
          %p276 = pneg %p78
        $region14: #{tpu_custom_call.1} parent=11 // pred_check_branch
          %278 = sbr.rel (%p276) target = $region16
        $region15: #{tpu_custom_call.1} parent=11 // pred_region
          %s280 = ssub.s32 2048, 2048
          %281 = vsyncadd [#allocation6], %s280
          %s282 = sshll.u32 [#allocation5], 4
          %s283 = int_to_ptr.vmem [resolvable:$true] %s282
          %288 = dma.hbm_to_vmem [thread:$0]  %s1, 2048, %s283, [#allocation6], 64, 64, 4
        $region16: #{tpu_custom_call.1} parent=11 // pred_fallthru
          _
        // Predicated region
        $region17: #{tpu_custom_call.1} parent=11 // pred_check
          %p289 = pneg %p99
        $region18: #{tpu_custom_call.1} parent=11 // pred_check_branch
          %291 = sbr.rel (%p289) target = $region20
        $region19: #{tpu_custom_call.1} parent=11 // pred_region
          %s293 = ssub.s32 16, 16
          %294 = vsyncadd [#allocation6], %s293
          %s296 = sshll.u32 [#allocation7], 4
          %s297 = int_to_ptr.vmem [resolvable:$true] %s296
          %299 = dma.hbm_to_vmem [thread:$0]  %s2, 16, %s297, [#allocation6]
        $region20: #{tpu_custom_call.1} parent=11 // pred_fallthru
          _
        // Predicated region
        $region21: #{tpu_custom_call.1} parent=11 // pred_check
          %p300 = pneg %p120
        $region22: #{tpu_custom_call.1} parent=11 // pred_check_branch
          %302 = sbr.rel (%p300) target = $region24
        $region23: #{tpu_custom_call.1} parent=11 // pred_region
          %s304 = ssub.s32 1024, 1024
          %305 = vsyncadd [#allocation9], %s304
          %s306 = sshll.u32 [#allocation8], 4
          %s307 = int_to_ptr.vmem [resolvable:$true] %s306
          %312 = dma.hbm_to_vmem [thread:$0]  %s3, 1024, %s307, [#allocation9], 64, 64, 4
        $region24: #{tpu_custom_call.1} parent=11 // pred_fallthru
          _
        // Predicated region
        $region25: #{tpu_custom_call.1} parent=11 // pred_check
          %p313 = pneg %p141
        $region26: #{tpu_custom_call.1} parent=11 // pred_check_branch
          %315 = sbr.rel (%p313) target = $region28
        $region27: #{tpu_custom_call.1} parent=11 // pred_region
          %s317 = ssub.s32 16, 16
          %318 = vsyncadd [#allocation9], %s317
          %s320 = sshll.u32 [#allocation10], 4
          %s321 = int_to_ptr.vmem [resolvable:$true] %s320
          %323 = dma.hbm_to_vmem [thread:$0]  %s4, 16, %s321, [#allocation9]
        $region28: #{tpu_custom_call.1} parent=11 // pred_fallthru
          _
        // Predicated region
        $region29: #{tpu_custom_call.1} parent=11 // pred_check
          %p324 = pneg %p188
        $region30: #{tpu_custom_call.1} parent=11 // pred_check_branch
          %326 = sbr.rel (%p324) target = $region32
        $region31: #{tpu_custom_call.1} parent=11 // pred_region
          %s328 = ssub.s32 256, 256
          %329 = vsyncadd [#allocation12], %s328
          %s330 = sshll.u32 [#allocation13], 4
          %s331 = int_to_ptr.vmem [resolvable:$true] %s330
          %336 = dma.hbm_to_vmem [thread:$0]  %s6, 256, %s331, [#allocation12], 128, 128, 8
        $region32: #{tpu_custom_call.1} parent=11 // pred_fallthru
          _
        // Predicated region
        $region33: #{tpu_custom_call.1} parent=11 // pred_check
          %p337 = pneg %p209
        $region34: #{tpu_custom_call.1} parent=11 // pred_check_branch
          %339 = sbr.rel (%p337) target = $region36
        $region35: #{tpu_custom_call.1} parent=11 // pred_region
          %s341 = ssub.s32 32, 32
          %342 = vsyncadd [#allocation15], %s341
          %s344 = sshll.u32 [#allocation14], 4
          %s345 = int_to_ptr.vmem [resolvable:$true] %s344
          %347 = dma.hbm_to_vmem [thread:$0]  %s7, 32, %s345, [#allocation15]
        $region36: #{tpu_custom_call.1} parent=11 // pred_fallthru
          _
      $region12: #{tpu_custom_call.1} parent=5 // pred_fallthru
        _
      %p348 = scmp.lt.s32.totalorder %s31, 2
      // Predicated region
      $region37: #{tpu_custom_call.1} parent=5 // pred_check
        %p349 = pneg %p348
      $region38: #{tpu_custom_call.1} parent=5 // pred_check_branch
        %351 = sbr.rel (%p349) target = $region40
      $region39: #{tpu_custom_call.1} parent=5 // pred_region
        // Predicated region
        $region41: #{tpu_custom_call.1} parent=39 // pred_check
          %p352 = pneg %p51
        $region42: #{tpu_custom_call.1} parent=39 // pred_check_branch
          %354 = sbr.rel (%p352) target = $region44
        $region43: #{tpu_custom_call.1} parent=39 // pred_region
          %s355 = sand.u32 %s41, 1
          %s356 = scalar_lea.sflag [#allocation3], %s355
          %s357 = sand.u32 %s41, 1
          %s358 = smul.addr %s357, 256
          %s359 = scalar_lea.vmem [#allocation2], %s358
          %s360 = smul.u32 16, %s31
          %s362 = ssub.s32 4096, 4096
          %363 = vsyncadd %s356, %s362
          %s364 = smul.addr %s360, 2
          %s365 = smul.addr %s364, 128
          %s366 = scalar_lea.hbm %s0, %s365
          %s367 = sshll.u32 %s359, 4
          %s368 = int_to_ptr.vmem [resolvable:$true] %s367
          %373 = dma.hbm_to_vmem [thread:$0]  %s366, 4096, %s368, %s356, 256, 256, 16
        $region44: #{tpu_custom_call.1} parent=39 // pred_fallthru
          _
        // Predicated region
        $region45: #{tpu_custom_call.1} parent=39 // pred_check
          %p374 = pneg %p161
        $region46: #{tpu_custom_call.1} parent=39 // pred_check_branch
          %376 = sbr.rel (%p374) target = $region48
        $region47: #{tpu_custom_call.1} parent=39 // pred_region
          %s377 = sand.u32 %s31, 1
          %s378 = scalar_lea.sflag [#allocation12], %s377
          %s379 = sand.u32 %s151, 1
          %s380 = smul.addr %s379, 128
          %s381 = scalar_lea.vmem [#allocation11], %s380
          %s382 = smul.u32 16, %s31
          %s384 = ssub.s32 2048, 2048
          %385 = vsyncadd %s378, %s384
          %s386 = smul.addr %s382, 128
          %s387 = scalar_lea.hbm %s5, %s386
          %s388 = sshll.u32 %s381, 4
          %s389 = int_to_ptr.vmem [resolvable:$true] %s388
          %394 = dma.hbm_to_vmem [thread:$0]  %s387, 2048, %s389, %s378, 128, 128, 8
        $region48: #{tpu_custom_call.1} parent=39 // pred_fallthru
          _
      $region40: #{tpu_custom_call.1} parent=5 // pred_fallthru
        _
      %p395 = scmp.le.s32.totalorder 1, %s31
      %p396 = scmp.lt.s32.totalorder %s31, 3
      %p397 = pnand %p395, %p396
      %p398 = pneg %p397
      // Predicated region
      $region49: #{tpu_custom_call.1} parent=5 // pred_check
        _
      $region50: #{tpu_custom_call.1} parent=5 // pred_check_branch
        %400 = sbr.rel (%p397) target = $region52
      $region51: #{tpu_custom_call.1} parent=5 // pred_region
        %s401 = ssub.s32 %s31, 1
        %s402 = sand.u32 %s44, 1
        %s403 = scalar_lea.sflag [#allocation3], %s402
        %s404 = sand.u32 %s44, 1
        %s405 = smul.addr %s404, 256
        %s406 = scalar_lea.vmem [#allocation2], %s405
        // Predicated region
        $region53: #{tpu_custom_call.1} parent=51 // pred_check
          %p407 = pneg %p57
        $region54: #{tpu_custom_call.1} parent=51 // pred_check_branch
          %409 = sbr.rel (%p407) target = $region56
        $region55: #{tpu_custom_call.1} parent=51 // pred_region
          %410 = dma.done %s403, 4096
        $region56: #{tpu_custom_call.1} parent=51 // pred_fallthru
          _
        // Predicated region
        $region57: #{tpu_custom_call.1} parent=51 // pred_check
          %p411 = pneg %p78
        $region58: #{tpu_custom_call.1} parent=51 // pred_check_branch
          %413 = sbr.rel (%p411) target = $region60
        $region59: #{tpu_custom_call.1} parent=51 // pred_region
          %414 = dma.done [#allocation6], 2048
        $region60: #{tpu_custom_call.1} parent=51 // pred_fallthru
          _
        // Predicated region
        $region61: #{tpu_custom_call.1} parent=51 // pred_check
          %p415 = pneg %p99
        $region62: #{tpu_custom_call.1} parent=51 // pred_check_branch
          %417 = sbr.rel (%p415) target = $region64
        $region63: #{tpu_custom_call.1} parent=51 // pred_region
          %418 = dma.done [#allocation6], 16
        $region64: #{tpu_custom_call.1} parent=51 // pred_fallthru
          _
        // Predicated region
        $region65: #{tpu_custom_call.1} parent=51 // pred_check
          %p419 = pneg %p120
        $region66: #{tpu_custom_call.1} parent=51 // pred_check_branch
          %421 = sbr.rel (%p419) target = $region68
        $region67: #{tpu_custom_call.1} parent=51 // pred_region
          %422 = dma.done [#allocation9], 1024
        $region68: #{tpu_custom_call.1} parent=51 // pred_fallthru
          _
        // Predicated region
        $region69: #{tpu_custom_call.1} parent=51 // pred_check
          %p423 = pneg %p141
        $region70: #{tpu_custom_call.1} parent=51 // pred_check_branch
          %425 = sbr.rel (%p423) target = $region72
        $region71: #{tpu_custom_call.1} parent=51 // pred_region
          %426 = dma.done [#allocation9], 16
        $region72: #{tpu_custom_call.1} parent=51 // pred_fallthru
          _
        %s427 = sand.u32 %s36, 1
        %s428 = scalar_lea.sflag [#allocation12], %s427
        %s429 = sand.u32 %s154, 1
        %s430 = smul.addr %s429, 128
        %s431 = scalar_lea.vmem [#allocation11], %s430
        // Predicated region
        $region73: #{tpu_custom_call.1} parent=51 // pred_check
          %p432 = pneg %p167
        $region74: #{tpu_custom_call.1} parent=51 // pred_check_branch
          %434 = sbr.rel (%p432) target = $region76
        $region75: #{tpu_custom_call.1} parent=51 // pred_region
          %435 = dma.done %s428, 2048
        $region76: #{tpu_custom_call.1} parent=51 // pred_fallthru
          _
        // Predicated region
        $region77: #{tpu_custom_call.1} parent=51 // pred_check
          %p436 = pneg %p188
        $region78: #{tpu_custom_call.1} parent=51 // pred_check_branch
          %438 = sbr.rel (%p436) target = $region80
        $region79: #{tpu_custom_call.1} parent=51 // pred_region
          %439 = dma.done [#allocation12], 256
        $region80: #{tpu_custom_call.1} parent=51 // pred_fallthru
          _
        // Predicated region
        $region81: #{tpu_custom_call.1} parent=51 // pred_check
          %p440 = pneg %p209
        $region82: #{tpu_custom_call.1} parent=51 // pred_check_branch
          %442 = sbr.rel (%p440) target = $region84
        $region83: #{tpu_custom_call.1} parent=51 // pred_region
          %443 = dma.done [#allocation15], 32
        $region84: #{tpu_custom_call.1} parent=51 // pred_fallthru
          _
        %s444 = sand.u32 %s44, 1
        %s445 = scalar_lea.sflag [#allocation3], %s444
        %s446 = sand.u32 %s44, 1
        %s447 = smul.addr %s446, 256
        %s448 = scalar_lea.vmem [#allocation2], %s447
        %p449 = pneg %p57
        %p450 = pneg %p54
        %p451 = pneg %p78
        %p452 = pneg %p75
        %p453 = pneg %p99
        %p454 = pneg %p96
        %p455 = pneg %p120
        %p456 = pneg %p117
        %p457 = pneg %p141
        %p458 = pneg %p138
        %s459 = sand.u32 %s36, 1
        %s460 = scalar_lea.sflag [#allocation12], %s459
        %s461 = sand.u32 %s154, 1
        %s462 = smul.addr %s461, 128
        %s463 = scalar_lea.vmem [#allocation11], %s462
        %p464 = pneg %p167
        %p465 = pneg %p164
        %p466 = pneg %p188
        %p467 = pneg %p185
        %p468 = pneg %p209
        %p469 = pneg %p206
        %p470 = pneg %p235
        %p471 = pneg %p232
        %s472 = sand.u32 %s222, 1
        %s473 = scalar_lea.sflag [#allocation4], %s472
        %s474 = sand.u32 %s222, 1
        %s475 = smul.addr %s474, 256
        %s476 = scalar_lea.vmem [#allocation16], %s475
        %p477 = pneg %p261
        %p478 = pneg %p258
        %s479 = sand.u32 %s248, 1
        %s480 = scalar_lea.sflag [#allocation18], %s479
        %s481 = sand.u32 %s248, 1
        %s482 = smul.addr %s481, 128
        %s483 = scalar_lea.vmem [#allocation17], %s482
        %s484 = smul.u32 16, %s36
        %s485 = smul.u32 16, %s36
        %s486 = smul.u32 16, %s36
        %s487 = smul.u32 16, %s36
        %v489 = vld [vmem:[%s406] sm:$0xff]
        %v490 = vld [vmem:[%s406 + $0x8] sm:$0xff]
        %v491 = vld [vmem:[%s406 + $0x10] sm:$0xff]
        %v492 = vld [vmem:[%s406 + $0x18] sm:$0xff]
        %v493 = vld [vmem:[%s406 + $0x20] sm:$0xff]
        %v494 = vld [vmem:[%s406 + $0x28] sm:$0xff]
        %v495 = vld [vmem:[%s406 + $0x30] sm:$0xff]
        %v496 = vld [vmem:[%s406 + $0x38] sm:$0xff]
        %v497 = vld [vmem:[%s406 + $0x40] sm:$0xff]
        %v498 = vld [vmem:[%s406 + $0x48] sm:$0xff]
        %v499 = vld [vmem:[%s406 + $0x50] sm:$0xff]
        %v500 = vld [vmem:[%s406 + $0x58] sm:$0xff]
        %v501 = vld [vmem:[%s406 + $0x60] sm:$0xff]
        %v502 = vld [vmem:[%s406 + $0x68] sm:$0xff]
        %v503 = vld [vmem:[%s406 + $0x70] sm:$0xff]
        %v504 = vld [vmem:[%s406 + $0x78] sm:$0xff]
        %v505 = vld [vmem:[%s406 + $0x80] sm:$0xff]
        %v506 = vld [vmem:[%s406 + $0x88] sm:$0xff]
        %v507 = vld [vmem:[%s406 + $0x90] sm:$0xff]
        %v508 = vld [vmem:[%s406 + $0x98] sm:$0xff]
        %v509 = vld [vmem:[%s406 + $0xa0] sm:$0xff]
        %v510 = vld [vmem:[%s406 + $0xa8] sm:$0xff]
        %v511 = vld [vmem:[%s406 + $0xb0] sm:$0xff]
        %v512 = vld [vmem:[%s406 + $0xb8] sm:$0xff]
        %v513 = vld [vmem:[%s406 + $0xc0] sm:$0xff]
        %v514 = vld [vmem:[%s406 + $0xc8] sm:$0xff]
        %v515 = vld [vmem:[%s406 + $0xd0] sm:$0xff]
        %v516 = vld [vmem:[%s406 + $0xd8] sm:$0xff]
        %v517 = vld [vmem:[%s406 + $0xe0] sm:$0xff]
        %v518 = vld [vmem:[%s406 + $0xe8] sm:$0xff]
        %v519 = vld [vmem:[%s406 + $0xf0] sm:$0xff]
        %v520 = vld [vmem:[%s406 + $0xf8] sm:$0xff]
        %v521 = vpack.c.bf16 %v491, %v489
        %v522 = vpack.c.bf16 %v492, %v490
        %v523 = vpack.c.bf16 %v495, %v493
        %v524 = vpack.c.bf16 %v496, %v494
        %v525 = vpack.c.bf16 %v499, %v497
        %v526 = vpack.c.bf16 %v500, %v498
        %v527 = vpack.c.bf16 %v503, %v501
        %v528 = vpack.c.bf16 %v504, %v502
        %v529 = vpack.c.bf16 %v507, %v505
        %v530 = vpack.c.bf16 %v508, %v506
        %v531 = vpack.c.bf16 %v511, %v509
        %v532 = vpack.c.bf16 %v512, %v510
        %v533 = vpack.c.bf16 %v515, %v513
        %v534 = vpack.c.bf16 %v516, %v514
        %v535 = vpack.c.bf16 %v519, %v517
        %v536 = vpack.c.bf16 %v520, %v518
        %v537 = vld [vmem:[#allocation5] sm:$0xf]
        %v538 = vld [vmem:[#allocation5 + $0x4] sm:$0xf]
        %v539 = vld [vmem:[#allocation5 + $0x8] sm:$0xf]
        %v540 = vld [vmem:[#allocation5 + $0xc] sm:$0xf]
        %v541 = vld [vmem:[#allocation5 + $0x10] sm:$0xf]
        %v542 = vld [vmem:[#allocation5 + $0x14] sm:$0xf]
        %v543 = vld [vmem:[#allocation5 + $0x18] sm:$0xf]
        %v544 = vld [vmem:[#allocation5 + $0x1c] sm:$0xf]
        %v545 = vld [vmem:[#allocation5 + $0x20] sm:$0xf]
        %v546 = vld [vmem:[#allocation5 + $0x24] sm:$0xf]
        %v547 = vld [vmem:[#allocation5 + $0x28] sm:$0xf]
        %v548 = vld [vmem:[#allocation5 + $0x2c] sm:$0xf]
        %v549 = vld [vmem:[#allocation5 + $0x30] sm:$0xf]
        %v550 = vld [vmem:[#allocation5 + $0x34] sm:$0xf]
        %v551 = vld [vmem:[#allocation5 + $0x38] sm:$0xf]
        %v552 = vld [vmem:[#allocation5 + $0x3c] sm:$0xf]
        %v553 = vld [vmem:[#allocation5 + $0x40] sm:$0xf]
        %v554 = vld [vmem:[#allocation5 + $0x44] sm:$0xf]
        %v555 = vld [vmem:[#allocation5 + $0x48] sm:$0xf]
        %v556 = vld [vmem:[#allocation5 + $0x4c] sm:$0xf]
        %v557 = vld [vmem:[#allocation5 + $0x50] sm:$0xf]
        %v558 = vld [vmem:[#allocation5 + $0x54] sm:$0xf]
        %v559 = vld [vmem:[#allocation5 + $0x58] sm:$0xf]
        %v560 = vld [vmem:[#allocation5 + $0x5c] sm:$0xf]
        %v561 = vld [vmem:[#allocation5 + $0x60] sm:$0xf]
        %v562 = vld [vmem:[#allocation5 + $0x64] sm:$0xf]
        %v563 = vld [vmem:[#allocation5 + $0x68] sm:$0xf]
        %v564 = vld [vmem:[#allocation5 + $0x6c] sm:$0xf]
        %v565 = vld [vmem:[#allocation5 + $0x70] sm:$0xf]
        %v566 = vld [vmem:[#allocation5 + $0x74] sm:$0xf]
        %v567 = vld [vmem:[#allocation5 + $0x78] sm:$0xf]
        %v568 = vld [vmem:[#allocation5 + $0x7c] sm:$0xf]
        %v569 = vld [vmem:[#allocation7] sm:$0x1]
        %v571 = vlaneseq
        %v572 = vshrl.u32 %v571, 7
        %v573 = vsub.s32 0, %v572
        %v574 = vrot.slane %v569, %v573
        %v608 = vunpack.c.l.b16 %v537
        %v609 = vunpack.c.l.b16 %v538
        %v610 = vunpack.c.l.b16 %v539
        %v611 = vunpack.c.l.b16 %v540
        %v612 = vunpack.c.l.b16 %v541
        %v613 = vunpack.c.l.b16 %v542
        %v614 = vunpack.c.l.b16 %v543
        %v615 = vunpack.c.l.b16 %v544
        %v616 = vunpack.c.l.b16 %v545
        %v617 = vunpack.c.l.b16 %v546
        %v618 = vunpack.c.l.b16 %v547
        %v619 = vunpack.c.l.b16 %v548
        %v620 = vunpack.c.l.b16 %v549
        %v621 = vunpack.c.l.b16 %v550
        %v622 = vunpack.c.l.b16 %v551
        %v623 = vunpack.c.l.b16 %v552
        %v624 = vunpack.c.l.b16 %v553
        %v625 = vunpack.c.l.b16 %v554
        %v626 = vunpack.c.l.b16 %v555
        %v627 = vunpack.c.l.b16 %v556
        %v628 = vunpack.c.l.b16 %v557
        %v629 = vunpack.c.l.b16 %v558
        %v630 = vunpack.c.l.b16 %v559
        %v631 = vunpack.c.l.b16 %v560
        %v632 = vunpack.c.l.b16 %v561
        %v633 = vunpack.c.l.b16 %v562
        %v634 = vunpack.c.l.b16 %v563
        %v635 = vunpack.c.l.b16 %v564
        %v636 = vunpack.c.l.b16 %v565
        %v637 = vunpack.c.l.b16 %v566
        %v638 = vunpack.c.l.b16 %v567
        %v639 = vunpack.c.l.b16 %v568
        %v640 = vpack.c.b16 %v609, %v608
        %v641 = vpack.c.b16 %v611, %v610
        %v642 = vpack.c.b16 %v613, %v612
        %v643 = vpack.c.b16 %v615, %v614
        %v644 = vpack.c.b16 %v617, %v616
        %v645 = vpack.c.b16 %v619, %v618
        %v646 = vpack.c.b16 %v621, %v620
        %v647 = vpack.c.b16 %v623, %v622
        %v648 = vpack.c.b16 %v625, %v624
        %v649 = vpack.c.b16 %v627, %v626
        %v650 = vpack.c.b16 %v629, %v628
        %v651 = vpack.c.b16 %v631, %v630
        %v652 = vpack.c.b16 %v633, %v632
        %v653 = vpack.c.b16 %v635, %v634
        %v654 = vpack.c.b16 %v637, %v636
        %v655 = vpack.c.b16 %v639, %v638
        %672 = vmatprep.subr.bf16.mxu0 0
        %673 = vmatpush1.bf16.msra.mxu0 %v640
        %674 = vmatprep.subr.bf16.mxu0 0
        %675 = vmatpush1.bf16.msra.mxu0 %v641
        %676 = vmatprep.subr.bf16.mxu0 0
        %677 = vmatpush1.bf16.msra.mxu0 %v642
        %678 = vmatprep.subr.bf16.mxu0 0
        %679 = vmatpush1.bf16.msra.mxu0 %v643
        %680 = vmatprep.subr.bf16.mxu0 0
        %681 = vmatpush1.bf16.msra.mxu0 %v644
        %682 = vmatprep.subr.bf16.mxu0 0
        %683 = vmatpush1.bf16.msra.mxu0 %v645
        %684 = vmatprep.subr.bf16.mxu0 0
        %685 = vmatpush1.bf16.msra.mxu0 %v646
        %686 = vmatprep.subr.bf16.mxu0 0
        %687 = vmatpush1.bf16.msra.mxu0 %v647
        %688 = vmatprep.subr.bf16.mxu0 0
        %689 = vmatpush1.bf16.msra.mxu0 %v648
        %690 = vmatprep.subr.bf16.mxu0 0
        %691 = vmatpush1.bf16.msra.mxu0 %v649
        %692 = vmatprep.subr.bf16.mxu0 0
        %693 = vmatpush1.bf16.msra.mxu0 %v650
        %694 = vmatprep.subr.bf16.mxu0 0
        %695 = vmatpush1.bf16.msra.mxu0 %v651
        %696 = vmatprep.subr.bf16.mxu0 0
        %697 = vmatpush1.bf16.msra.mxu0 %v652
        %698 = vmatprep.subr.bf16.mxu0 0
        %699 = vmatpush1.bf16.msra.mxu0 %v653
        %700 = vmatprep.subr.bf16.mxu0 0
        %701 = vmatpush1.bf16.msra.mxu0 %v654
        %702 = vmatprep.subr.bf16.mxu0 0
        %703 = vmatpush1.bf16.msra.mxu0 %v655
        %704 = vmatprep.mubr.bf16.mxu0 %v522
        %705 = vmatmul.mubr.bf16.gmra.mrb[0].mxu0 %v521
        %v706 = vpop.f32.mrb[0].mxu0
        %v707 = vadd.f32 %v574, %v706
        %v708 = vpop.f32.mrb[0].mxu0
        %v709 = vpop.f32.mrb[0].mxu0
        %v710 = vadd.f32 %v574, %v709
        %v711 = vpop.f32.mrb[0].mxu0
        %712 = vmatprep.mubr.bf16.mxu0 %v524
        %713 = vmatmul.mubr.bf16.gmra.mrb[0].mxu0 %v523
        %v714 = vpop.f32.mrb[0].mxu0
        %v715 = vadd.f32 %v574, %v714
        %v716 = vpop.f32.mrb[0].mxu0
        %v717 = vpop.f32.mrb[0].mxu0
        %v718 = vadd.f32 %v574, %v717
        %v719 = vpop.f32.mrb[0].mxu0
        %720 = vmatprep.mubr.bf16.mxu0 %v526
        %721 = vmatmul.mubr.bf16.gmra.mrb[0].mxu0 %v525
        %v722 = vpop.f32.mrb[0].mxu0
        %v723 = vadd.f32 %v574, %v722
        %v724 = vpop.f32.mrb[0].mxu0
        %v725 = vpop.f32.mrb[0].mxu0
        %v726 = vadd.f32 %v574, %v725
        %v727 = vpop.f32.mrb[0].mxu0
        %728 = vmatprep.mubr.bf16.mxu0 %v528
        %729 = vmatmul.mubr.bf16.gmra.mrb[0].mxu0 %v527
        %v730 = vpop.f32.mrb[0].mxu0
        %v731 = vadd.f32 %v574, %v730
        %v732 = vpop.f32.mrb[0].mxu0
        %v733 = vpop.f32.mrb[0].mxu0
        %v734 = vadd.f32 %v574, %v733
        %v735 = vpop.f32.mrb[0].mxu0
        %736 = vmatprep.mubr.bf16.mxu0 %v530
        %737 = vmatmul.mubr.bf16.gmra.mrb[0].mxu0 %v529
        %v738 = vpop.f32.mrb[0].mxu0
        %v739 = vadd.f32 %v574, %v738
        %v740 = vpop.f32.mrb[0].mxu0
        %v741 = vpop.f32.mrb[0].mxu0
        %v742 = vadd.f32 %v574, %v741
        %v743 = vpop.f32.mrb[0].mxu0
        %744 = vmatprep.mubr.bf16.mxu0 %v532
        %745 = vmatmul.mubr.bf16.gmra.mrb[0].mxu0 %v531
        %v746 = vpop.f32.mrb[0].mxu0
        %v747 = vadd.f32 %v574, %v746
        %v748 = vpop.f32.mrb[0].mxu0
        %v749 = vpop.f32.mrb[0].mxu0
        %v750 = vadd.f32 %v574, %v749
        %v751 = vpop.f32.mrb[0].mxu0
        %752 = vmatprep.mubr.bf16.mxu0 %v534
        %753 = vmatmul.mubr.bf16.gmra.mrb[0].mxu0 %v533
        %v754 = vpop.f32.mrb[0].mxu0
        %v755 = vadd.f32 %v574, %v754
        %v756 = vpop.f32.mrb[0].mxu0
        %v757 = vpop.f32.mrb[0].mxu0
        %v758 = vadd.f32 %v574, %v757
        %v759 = vpop.f32.mrb[0].mxu0
        %760 = vmatprep.mubr.bf16.mxu0 %v536
        %761 = vmatmul.mubr.bf16.gmra.mrb[0].mxu0 %v535
        %v762 = vpop.f32.mrb[0].mxu0
        %v763 = vadd.f32 %v574, %v762
        %v764 = vpop.f32.mrb[0].mxu0
        %v765 = vpop.f32.mrb[0].mxu0
        %v766 = vadd.f32 %v574, %v765
        %v767 = vpop.f32.mrb[0].mxu0
        %768 = vdwg.mxu0
        %v769 = vmax.f32 %v707, 0.0
        %v770 = vmax.f32 %v710, 0.0
        %v771 = vmax.f32 %v715, 0.0
        %v772 = vmax.f32 %v718, 0.0
        %v773 = vmax.f32 %v723, 0.0
        %v774 = vmax.f32 %v726, 0.0
        %v775 = vmax.f32 %v731, 0.0
        %v776 = vmax.f32 %v734, 0.0
        %v777 = vmax.f32 %v739, 0.0
        %v778 = vmax.f32 %v742, 0.0
        %v779 = vmax.f32 %v747, 0.0
        %v780 = vmax.f32 %v750, 0.0
        %v781 = vmax.f32 %v755, 0.0
        %v782 = vmax.f32 %v758, 0.0
        %v783 = vmax.f32 %v763, 0.0
        %v784 = vmax.f32 %v766, 0.0
        %v785 = vand.u32 2147483647, %v707
        %v786 = vand.u32 2147483647, %v710
        %v787 = vand.u32 2147483647, %v715
        %v788 = vand.u32 2147483647, %v718
        %v789 = vand.u32 2147483647, %v723
        %v790 = vand.u32 2147483647, %v726
        %v791 = vand.u32 2147483647, %v731
        %v792 = vand.u32 2147483647, %v734
        %v793 = vand.u32 2147483647, %v739
        %v794 = vand.u32 2147483647, %v742
        %v795 = vand.u32 2147483647, %v747
        %v796 = vand.u32 2147483647, %v750
        %v797 = vand.u32 2147483647, %v755
        %v798 = vand.u32 2147483647, %v758
        %v799 = vand.u32 2147483647, %v763
        %v800 = vand.u32 2147483647, %v766
        %v801 = vsub.f32 0.0, %v785
        %v802 = vsub.f32 0.0, %v786
        %v803 = vsub.f32 0.0, %v787
        %v804 = vsub.f32 0.0, %v788
        %v805 = vsub.f32 0.0, %v789
        %v806 = vsub.f32 0.0, %v790
        %v807 = vsub.f32 0.0, %v791
        %v808 = vsub.f32 0.0, %v792
        %v809 = vsub.f32 0.0, %v793
        %v810 = vsub.f32 0.0, %v794
        %v811 = vsub.f32 0.0, %v795
        %v812 = vsub.f32 0.0, %v796
        %v813 = vsub.f32 0.0, %v797
        %v814 = vsub.f32 0.0, %v798
        %v815 = vsub.f32 0.0, %v799
        %v816 = vsub.f32 0.0, %v800
        %v817 = vmul.f32 %v801, 1.442695
        %v818 = vpow.pop %v817
        %v819 = vmul.f32 %v802, 1.442695
        %v820 = vpow.pop %v819
        %v821 = vmul.f32 %v803, 1.442695
        %v822 = vpow.pop %v821
        %v823 = vmul.f32 %v804, 1.442695
        %v824 = vpow.pop %v823
        %v825 = vmul.f32 %v805, 1.442695
        %v826 = vpow.pop %v825
        %v827 = vmul.f32 %v806, 1.442695
        %v828 = vpow.pop %v827
        %v829 = vmul.f32 %v807, 1.442695
        %v830 = vpow.pop %v829
        %v831 = vmul.f32 %v808, 1.442695
        %v832 = vpow.pop %v831
        %v833 = vmul.f32 %v809, 1.442695
        %v834 = vpow.pop %v833
        %v835 = vmul.f32 %v810, 1.442695
        %v836 = vpow.pop %v835
        %v837 = vmul.f32 %v811, 1.442695
        %v838 = vpow.pop %v837
        %v839 = vmul.f32 %v812, 1.442695
        %v840 = vpow.pop %v839
        %v841 = vmul.f32 %v813, 1.442695
        %v842 = vpow.pop %v841
        %v843 = vmul.f32 %v814, 1.442695
        %v844 = vpow.pop %v843
        %v845 = vmul.f32 %v815, 1.442695
        %v846 = vpow.pop %v845
        %v847 = vmul.f32 %v816, 1.442695
        %v848 = vpow.pop %v847
        %v849 = vadd.f32 %v818, 1.0
        %v850 = vlog2.pop %v849
        %v851 = vmul.f32 %v850, 0.6931472
        %v852 = vmul.f32 -0.5, %v818
        %v853 = vadd.f32 %v852, 1.0
        %v854 = vmul.f32 %v853, %v818
        %v855 = vand.u32 2147483647, %v818
        %vm856 = vcmp.lt.f32.partialorder %v855, 0.0004427343
        %v857 = vsel %vm856, %v854, %v851
        %v858 = vadd.f32 %v820, 1.0
        %v859 = vlog2.pop %v858
        %v860 = vmul.f32 %v859, 0.6931472
        %v861 = vmul.f32 -0.5, %v820
        %v862 = vadd.f32 %v861, 1.0
        %v863 = vmul.f32 %v862, %v820
        %v864 = vand.u32 2147483647, %v820
        %vm865 = vcmp.lt.f32.partialorder %v864, 0.0004427343
        %v866 = vsel %vm865, %v863, %v860
        %v867 = vadd.f32 %v822, 1.0
        %v868 = vlog2.pop %v867
        %v869 = vmul.f32 %v868, 0.6931472
        %v870 = vmul.f32 -0.5, %v822
        %v871 = vadd.f32 %v870, 1.0
        %v872 = vmul.f32 %v871, %v822
        %v873 = vand.u32 2147483647, %v822
        %vm874 = vcmp.lt.f32.partialorder %v873, 0.0004427343
        %v875 = vsel %vm874, %v872, %v869
        %v876 = vadd.f32 %v824, 1.0
        %v877 = vlog2.pop %v876
        %v878 = vmul.f32 %v877, 0.6931472
        %v879 = vmul.f32 -0.5, %v824
        %v880 = vadd.f32 %v879, 1.0
        %v881 = vmul.f32 %v880, %v824
        %v882 = vand.u32 2147483647, %v824
        %vm883 = vcmp.lt.f32.partialorder %v882, 0.0004427343
        %v884 = vsel %vm883, %v881, %v878
        %v885 = vadd.f32 %v826, 1.0
        %v886 = vlog2.pop %v885
        %v887 = vmul.f32 %v886, 0.6931472
        %v888 = vmul.f32 -0.5, %v826
        %v889 = vadd.f32 %v888, 1.0
        %v890 = vmul.f32 %v889, %v826
        %v891 = vand.u32 2147483647, %v826
        %vm892 = vcmp.lt.f32.partialorder %v891, 0.0004427343
        %v893 = vsel %vm892, %v890, %v887
        %v894 = vadd.f32 %v828, 1.0
        %v895 = vlog2.pop %v894
        %v896 = vmul.f32 %v895, 0.6931472
        %v897 = vmul.f32 -0.5, %v828
        %v898 = vadd.f32 %v897, 1.0
        %v899 = vmul.f32 %v898, %v828
        %v900 = vand.u32 2147483647, %v828
        %vm901 = vcmp.lt.f32.partialorder %v900, 0.0004427343
        %v902 = vsel %vm901, %v899, %v896
        %v903 = vadd.f32 %v830, 1.0
        %v904 = vlog2.pop %v903
        %v905 = vmul.f32 %v904, 0.6931472
        %v906 = vmul.f32 -0.5, %v830
        %v907 = vadd.f32 %v906, 1.0
        %v908 = vmul.f32 %v907, %v830
        %v909 = vand.u32 2147483647, %v830
        %vm910 = vcmp.lt.f32.partialorder %v909, 0.0004427343
        %v911 = vsel %vm910, %v908, %v905
        %v912 = vadd.f32 %v832, 1.0
        %v913 = vlog2.pop %v912
        %v914 = vmul.f32 %v913, 0.6931472
        %v915 = vmul.f32 -0.5, %v832
        %v916 = vadd.f32 %v915, 1.0
        %v917 = vmul.f32 %v916, %v832
        %v918 = vand.u32 2147483647, %v832
        %vm919 = vcmp.lt.f32.partialorder %v918, 0.0004427343
        %v920 = vsel %vm919, %v917, %v914
        %v921 = vadd.f32 %v834, 1.0
        %v922 = vlog2.pop %v921
        %v923 = vmul.f32 %v922, 0.6931472
        %v924 = vmul.f32 -0.5, %v834
        %v925 = vadd.f32 %v924, 1.0
        %v926 = vmul.f32 %v925, %v834
        %v927 = vand.u32 2147483647, %v834
        %vm928 = vcmp.lt.f32.partialorder %v927, 0.0004427343
        %v929 = vsel %vm928, %v926, %v923
        %v930 = vadd.f32 %v836, 1.0
        %v931 = vlog2.pop %v930
        %v932 = vmul.f32 %v931, 0.6931472
        %v933 = vmul.f32 -0.5, %v836
        %v934 = vadd.f32 %v933, 1.0
        %v935 = vmul.f32 %v934, %v836
        %v936 = vand.u32 2147483647, %v836
        %vm937 = vcmp.lt.f32.partialorder %v936, 0.0004427343
        %v938 = vsel %vm937, %v935, %v932
        %v939 = vadd.f32 %v838, 1.0
        %v940 = vlog2.pop %v939
        %v941 = vmul.f32 %v940, 0.6931472
        %v942 = vmul.f32 -0.5, %v838
        %v943 = vadd.f32 %v942, 1.0
        %v944 = vmul.f32 %v943, %v838
        %v945 = vand.u32 2147483647, %v838
        %vm946 = vcmp.lt.f32.partialorder %v945, 0.0004427343
        %v947 = vsel %vm946, %v944, %v941
        %v948 = vadd.f32 %v840, 1.0
        %v949 = vlog2.pop %v948
        %v950 = vmul.f32 %v949, 0.6931472
        %v951 = vmul.f32 -0.5, %v840
        %v952 = vadd.f32 %v951, 1.0
        %v953 = vmul.f32 %v952, %v840
        %v954 = vand.u32 2147483647, %v840
        %vm955 = vcmp.lt.f32.partialorder %v954, 0.0004427343
        %v956 = vsel %vm955, %v953, %v950
        %v957 = vadd.f32 %v842, 1.0
        %v958 = vlog2.pop %v957
        %v959 = vmul.f32 %v958, 0.6931472
        %v960 = vmul.f32 -0.5, %v842
        %v961 = vadd.f32 %v960, 1.0
        %v962 = vmul.f32 %v961, %v842
        %v963 = vand.u32 2147483647, %v842
        %vm964 = vcmp.lt.f32.partialorder %v963, 0.0004427343
        %v965 = vsel %vm964, %v962, %v959
        %v966 = vadd.f32 %v844, 1.0
        %v967 = vlog2.pop %v966
        %v968 = vmul.f32 %v967, 0.6931472
        %v969 = vmul.f32 -0.5, %v844
        %v970 = vadd.f32 %v969, 1.0
        %v971 = vmul.f32 %v970, %v844
        %v972 = vand.u32 2147483647, %v844
        %vm973 = vcmp.lt.f32.partialorder %v972, 0.0004427343
        %v974 = vsel %vm973, %v971, %v968
        %v975 = vadd.f32 %v846, 1.0
        %v976 = vlog2.pop %v975
        %v977 = vmul.f32 %v976, 0.6931472
        %v978 = vmul.f32 -0.5, %v846
        %v979 = vadd.f32 %v978, 1.0
        %v980 = vmul.f32 %v979, %v846
        %v981 = vand.u32 2147483647, %v846
        %vm982 = vcmp.lt.f32.partialorder %v981, 0.0004427343
        %v983 = vsel %vm982, %v980, %v977
        %v984 = vadd.f32 %v848, 1.0
        %v985 = vlog2.pop %v984
        %v986 = vmul.f32 %v985, 0.6931472
        %v987 = vmul.f32 -0.5, %v848
        %v988 = vadd.f32 %v987, 1.0
        %v989 = vmul.f32 %v988, %v848
        %v990 = vand.u32 2147483647, %v848
        %vm991 = vcmp.lt.f32.partialorder %v990, 0.0004427343
        %v992 = vsel %vm991, %v989, %v986
        %v993 = vadd.f32 %v769, %v857
        %v994 = vadd.f32 %v770, %v866
        %v995 = vadd.f32 %v771, %v875
        %v996 = vadd.f32 %v772, %v884
        %v997 = vadd.f32 %v773, %v893
        %v998 = vadd.f32 %v774, %v902
        %v999 = vadd.f32 %v775, %v911
        %v1000 = vadd.f32 %v776, %v920
        %v1001 = vadd.f32 %v777, %v929
        %v1002 = vadd.f32 %v778, %v938
        %v1003 = vadd.f32 %v779, %v947
        %v1004 = vadd.f32 %v780, %v956
        %v1005 = vadd.f32 %v781, %v965
        %v1006 = vadd.f32 %v782, %v974
        %v1007 = vadd.f32 %v783, %v983
        %v1008 = vadd.f32 %v784, %v992
        %v1009 = vpack.c.bf16 %v994, %v993
        %v1010 = vpack.c.bf16 %v996, %v995
        %v1011 = vpack.c.bf16 %v998, %v997
        %v1012 = vpack.c.bf16 %v1000, %v999
        %v1013 = vpack.c.bf16 %v1002, %v1001
        %v1014 = vpack.c.bf16 %v1004, %v1003
        %v1015 = vpack.c.bf16 %v1006, %v1005
        %v1016 = vpack.c.bf16 %v1008, %v1007
        %v1017 = vld [vmem:[#allocation8] sm:$0xf]
        %v1018 = vld [vmem:[#allocation8 + $0x4] sm:$0xf]
        %v1019 = vld [vmem:[#allocation8 + $0x8] sm:$0xf]
        %v1020 = vld [vmem:[#allocation8 + $0xc] sm:$0xf]
        %v1021 = vld [vmem:[#allocation8 + $0x10] sm:$0xf]
        %v1022 = vld [vmem:[#allocation8 + $0x14] sm:$0xf]
        %v1023 = vld [vmem:[#allocation8 + $0x18] sm:$0xf]
        %v1024 = vld [vmem:[#allocation8 + $0x1c] sm:$0xf]
        %v1025 = vld [vmem:[#allocation8 + $0x20] sm:$0xf]
        %v1026 = vld [vmem:[#allocation8 + $0x24] sm:$0xf]
        %v1027 = vld [vmem:[#allocation8 + $0x28] sm:$0xf]
        %v1028 = vld [vmem:[#allocation8 + $0x2c] sm:$0xf]
        %v1029 = vld [vmem:[#allocation8 + $0x30] sm:$0xf]
        %v1030 = vld [vmem:[#allocation8 + $0x34] sm:$0xf]
        %v1031 = vld [vmem:[#allocation8 + $0x38] sm:$0xf]
        %v1032 = vld [vmem:[#allocation8 + $0x3c] sm:$0xf]
        %v1033 = vld [vmem:[#allocation10] sm:$0x1]
        %v1035 = vlaneseq
        %v1036 = vshrl.u32 %v1035, 7
        %v1037 = vsub.s32 0, %v1036
        %v1038 = vrot.slane %v1033, %v1037
        %v1056 = vunpack.c.l.b16 %v1017
        %v1057 = vunpack.c.l.b16 %v1018
        %v1058 = vunpack.c.l.b16 %v1019
        %v1059 = vunpack.c.l.b16 %v1020
        %v1060 = vunpack.c.l.b16 %v1021
        %v1061 = vunpack.c.l.b16 %v1022
        %v1062 = vunpack.c.l.b16 %v1023
        %v1063 = vunpack.c.l.b16 %v1024
        %v1064 = vunpack.c.l.b16 %v1025
        %v1065 = vunpack.c.l.b16 %v1026
        %v1066 = vunpack.c.l.b16 %v1027
        %v1067 = vunpack.c.l.b16 %v1028
        %v1068 = vunpack.c.l.b16 %v1029
        %v1069 = vunpack.c.l.b16 %v1030
        %v1070 = vunpack.c.l.b16 %v1031
        %v1071 = vunpack.c.l.b16 %v1032
        %v1072 = vpack.c.b16 %v1057, %v1056
        %v1073 = vpack.c.b16 %v1059, %v1058
        %v1074 = vpack.c.b16 %v1061, %v1060
        %v1075 = vpack.c.b16 %v1063, %v1062
        %v1076 = vpack.c.b16 %v1065, %v1064
        %v1077 = vpack.c.b16 %v1067, %v1066
        %v1078 = vpack.c.b16 %v1069, %v1068
        %v1079 = vpack.c.b16 %v1071, %v1070
        %1088 = vmatprep.subr.bf16.mxu0 0
        %1089 = vmatpush1.bf16.msra.mxu0 %v1072
        %1090 = vmatprep.subr.bf16.mxu0 0
        %1091 = vmatpush1.bf16.msra.mxu0 %v1073
        %1092 = vmatprep.subr.bf16.mxu0 0
        %1093 = vmatpush1.bf16.msra.mxu0 %v1074
        %1094 = vmatprep.subr.bf16.mxu0 0
        %1095 = vmatpush1.bf16.msra.mxu0 %v1075
        %1096 = vmatprep.subr.bf16.mxu0 0
        %1097 = vmatpush1.bf16.msra.mxu0 %v1076
        %1098 = vmatprep.subr.bf16.mxu0 0
        %1099 = vmatpush1.bf16.msra.mxu0 %v1077
        %1100 = vmatprep.subr.bf16.mxu0 0
        %1101 = vmatpush1.bf16.msra.mxu0 %v1078
        %1102 = vmatprep.subr.bf16.mxu0 0
        %1103 = vmatpush1.bf16.msra.mxu0 %v1079
        %1104 = vmatprep.subr.bf16.mxu0 0
        %1105 = vmatpush1.bf16.msra.mxu0 0
        %1106 = vmatprep.subr.bf16.mxu0 0
        %1107 = vmatpush1.bf16.msra.mxu0 0
        %1108 = vmatprep.subr.bf16.mxu0 0
        %1109 = vmatpush1.bf16.msra.mxu0 0
        %1110 = vmatprep.subr.bf16.mxu0 0
        %1111 = vmatpush1.bf16.msra.mxu0 0
        %1112 = vmatprep.subr.bf16.mxu0 0
        %1113 = vmatpush1.bf16.msra.mxu0 0
        %1114 = vmatprep.subr.bf16.mxu0 0
        %1115 = vmatpush1.bf16.msra.mxu0 0
        %1116 = vmatprep.subr.bf16.mxu0 0
        %1117 = vmatpush1.bf16.msra.mxu0 0
        %1118 = vmatprep.subr.bf16.mxu0 0
        %1119 = vmatpush1.bf16.msra.mxu0 0
        %1120 = vmatprep.mubr.bf16.mxu0 0
        %1121 = vmatmul.mubr.bf16.gmra.mrb[0].mxu0 %v1009
        %v1122 = vpop.f32.mrb[0].mxu0
        %v1123 = vadd.f32 %v1038, %v1122
        %v1124 = vpop.f32.mrb[0].mxu0
        %v1125 = vpop.f32.mrb[0].mxu0
        %v1126 = vadd.f32 %v1038, %v1125
        %v1127 = vpop.f32.mrb[0].mxu0
        %1128 = vmatprep.mubr.bf16.mxu0 0
        %1129 = vmatmul.mubr.bf16.gmra.mrb[0].mxu0 %v1010
        %v1130 = vpop.f32.mrb[0].mxu0
        %v1131 = vadd.f32 %v1038, %v1130
        %v1132 = vpop.f32.mrb[0].mxu0
        %v1133 = vpop.f32.mrb[0].mxu0
        %v1134 = vadd.f32 %v1038, %v1133
        %v1135 = vpop.f32.mrb[0].mxu0
        %1136 = vmatprep.mubr.bf16.mxu0 0
        %1137 = vmatmul.mubr.bf16.gmra.mrb[0].mxu0 %v1011
        %v1138 = vpop.f32.mrb[0].mxu0
        %v1139 = vadd.f32 %v1038, %v1138
        %v1140 = vpop.f32.mrb[0].mxu0
        %v1141 = vpop.f32.mrb[0].mxu0
        %v1142 = vadd.f32 %v1038, %v1141
        %v1143 = vpop.f32.mrb[0].mxu0
        %1144 = vmatprep.mubr.bf16.mxu0 0
        %1145 = vmatmul.mubr.bf16.gmra.mrb[0].mxu0 %v1012
        %v1146 = vpop.f32.mrb[0].mxu0
        %v1147 = vadd.f32 %v1038, %v1146
        %v1148 = vpop.f32.mrb[0].mxu0
        %v1149 = vpop.f32.mrb[0].mxu0
        %v1150 = vadd.f32 %v1038, %v1149
        %v1151 = vpop.f32.mrb[0].mxu0
        %1152 = vmatprep.mubr.bf16.mxu0 0
        %1153 = vmatmul.mubr.bf16.gmra.mrb[0].mxu0 %v1013
        %v1154 = vpop.f32.mrb[0].mxu0
        %v1155 = vadd.f32 %v1038, %v1154
        %v1156 = vpop.f32.mrb[0].mxu0
        %v1157 = vpop.f32.mrb[0].mxu0
        %v1158 = vadd.f32 %v1038, %v1157
        %v1159 = vpop.f32.mrb[0].mxu0
        %1160 = vmatprep.mubr.bf16.mxu0 0
        %1161 = vmatmul.mubr.bf16.gmra.mrb[0].mxu0 %v1014
        %v1162 = vpop.f32.mrb[0].mxu0
        %v1163 = vadd.f32 %v1038, %v1162
        %v1164 = vpop.f32.mrb[0].mxu0
        %v1165 = vpop.f32.mrb[0].mxu0
        %v1166 = vadd.f32 %v1038, %v1165
        %v1167 = vpop.f32.mrb[0].mxu0
        %1168 = vmatprep.mubr.bf16.mxu0 0
        %1169 = vmatmul.mubr.bf16.gmra.mrb[0].mxu0 %v1015
        %v1170 = vpop.f32.mrb[0].mxu0
        %v1171 = vadd.f32 %v1038, %v1170
        %v1172 = vpop.f32.mrb[0].mxu0
        %v1173 = vpop.f32.mrb[0].mxu0
        %v1174 = vadd.f32 %v1038, %v1173
        %v1175 = vpop.f32.mrb[0].mxu0
        %1176 = vmatprep.mubr.bf16.mxu0 0
        %1177 = vmatmul.mubr.bf16.gmra.mrb[0].mxu0 %v1016
        %v1178 = vpop.f32.mrb[0].mxu0
        %v1179 = vadd.f32 %v1038, %v1178
        %v1180 = vpop.f32.mrb[0].mxu0
        %v1181 = vpop.f32.mrb[0].mxu0
        %v1182 = vadd.f32 %v1038, %v1181
        %v1183 = vpop.f32.mrb[0].mxu0
        %1184 = vdwg.mxu0
        %v1185 = vmax.f32 %v1123, 0.0
        %v1186 = vmax.f32 %v1126, 0.0
        %v1187 = vmax.f32 %v1131, 0.0
        %v1188 = vmax.f32 %v1134, 0.0
        %v1189 = vmax.f32 %v1139, 0.0
        %v1190 = vmax.f32 %v1142, 0.0
        %v1191 = vmax.f32 %v1147, 0.0
        %v1192 = vmax.f32 %v1150, 0.0
        %v1193 = vmax.f32 %v1155, 0.0
        %v1194 = vmax.f32 %v1158, 0.0
        %v1195 = vmax.f32 %v1163, 0.0
        %v1196 = vmax.f32 %v1166, 0.0
        %v1197 = vmax.f32 %v1171, 0.0
        %v1198 = vmax.f32 %v1174, 0.0
        %v1199 = vmax.f32 %v1179, 0.0
        %v1200 = vmax.f32 %v1182, 0.0
        %v1201 = vand.u32 2147483647, %v1123
        %v1202 = vand.u32 2147483647, %v1126
        %v1203 = vand.u32 2147483647, %v1131
        %v1204 = vand.u32 2147483647, %v1134
        %v1205 = vand.u32 2147483647, %v1139
        %v1206 = vand.u32 2147483647, %v1142
        %v1207 = vand.u32 2147483647, %v1147
        %v1208 = vand.u32 2147483647, %v1150
        %v1209 = vand.u32 2147483647, %v1155
        %v1210 = vand.u32 2147483647, %v1158
        %v1211 = vand.u32 2147483647, %v1163
        %v1212 = vand.u32 2147483647, %v1166
        %v1213 = vand.u32 2147483647, %v1171
        %v1214 = vand.u32 2147483647, %v1174
        %v1215 = vand.u32 2147483647, %v1179
        %v1216 = vand.u32 2147483647, %v1182
        %v1217 = vsub.f32 0.0, %v1201
        %v1218 = vsub.f32 0.0, %v1202
        %v1219 = vsub.f32 0.0, %v1203
        %v1220 = vsub.f32 0.0, %v1204
        %v1221 = vsub.f32 0.0, %v1205
        %v1222 = vsub.f32 0.0, %v1206
        %v1223 = vsub.f32 0.0, %v1207
        %v1224 = vsub.f32 0.0, %v1208
        %v1225 = vsub.f32 0.0, %v1209
        %v1226 = vsub.f32 0.0, %v1210
        %v1227 = vsub.f32 0.0, %v1211
        %v1228 = vsub.f32 0.0, %v1212
        %v1229 = vsub.f32 0.0, %v1213
        %v1230 = vsub.f32 0.0, %v1214
        %v1231 = vsub.f32 0.0, %v1215
        %v1232 = vsub.f32 0.0, %v1216
        %v1233 = vmul.f32 %v1217, 1.442695
        %v1234 = vpow.pop %v1233
        %v1235 = vmul.f32 %v1218, 1.442695
        %v1236 = vpow.pop %v1235
        %v1237 = vmul.f32 %v1219, 1.442695
        %v1238 = vpow.pop %v1237
        %v1239 = vmul.f32 %v1220, 1.442695
        %v1240 = vpow.pop %v1239
        %v1241 = vmul.f32 %v1221, 1.442695
        %v1242 = vpow.pop %v1241
        %v1243 = vmul.f32 %v1222, 1.442695
        %v1244 = vpow.pop %v1243
        %v1245 = vmul.f32 %v1223, 1.442695
        %v1246 = vpow.pop %v1245
        %v1247 = vmul.f32 %v1224, 1.442695
        %v1248 = vpow.pop %v1247
        %v1249 = vmul.f32 %v1225, 1.442695
        %v1250 = vpow.pop %v1249
        %v1251 = vmul.f32 %v1226, 1.442695
        %v1252 = vpow.pop %v1251
        %v1253 = vmul.f32 %v1227, 1.442695
        %v1254 = vpow.pop %v1253
        %v1255 = vmul.f32 %v1228, 1.442695
        %v1256 = vpow.pop %v1255
        %v1257 = vmul.f32 %v1229, 1.442695
        %v1258 = vpow.pop %v1257
        %v1259 = vmul.f32 %v1230, 1.442695
        %v1260 = vpow.pop %v1259
        %v1261 = vmul.f32 %v1231, 1.442695
        %v1262 = vpow.pop %v1261
        %v1263 = vmul.f32 %v1232, 1.442695
        %v1264 = vpow.pop %v1263
        %v1265 = vadd.f32 %v1234, 1.0
        %v1266 = vlog2.pop %v1265
        %v1267 = vmul.f32 %v1266, 0.6931472
        %v1268 = vmul.f32 -0.5, %v1234
        %v1269 = vadd.f32 %v1268, 1.0
        %v1270 = vmul.f32 %v1269, %v1234
        %v1271 = vand.u32 2147483647, %v1234
        %vm1272 = vcmp.lt.f32.partialorder %v1271, 0.0004427343
        %v1273 = vsel %vm1272, %v1270, %v1267
        %v1274 = vadd.f32 %v1236, 1.0
        %v1275 = vlog2.pop %v1274
        %v1276 = vmul.f32 %v1275, 0.6931472
        %v1277 = vmul.f32 -0.5, %v1236
        %v1278 = vadd.f32 %v1277, 1.0
        %v1279 = vmul.f32 %v1278, %v1236
        %v1280 = vand.u32 2147483647, %v1236
        %vm1281 = vcmp.lt.f32.partialorder %v1280, 0.0004427343
        %v1282 = vsel %vm1281, %v1279, %v1276
        %v1283 = vadd.f32 %v1238, 1.0
        %v1284 = vlog2.pop %v1283
        %v1285 = vmul.f32 %v1284, 0.6931472
        %v1286 = vmul.f32 -0.5, %v1238
        %v1287 = vadd.f32 %v1286, 1.0
        %v1288 = vmul.f32 %v1287, %v1238
        %v1289 = vand.u32 2147483647, %v1238
        %vm1290 = vcmp.lt.f32.partialorder %v1289, 0.0004427343
        %v1291 = vsel %vm1290, %v1288, %v1285
        %v1292 = vadd.f32 %v1240, 1.0
        %v1293 = vlog2.pop %v1292
        %v1294 = vmul.f32 %v1293, 0.6931472
        %v1295 = vmul.f32 -0.5, %v1240
        %v1296 = vadd.f32 %v1295, 1.0
        %v1297 = vmul.f32 %v1296, %v1240
        %v1298 = vand.u32 2147483647, %v1240
        %vm1299 = vcmp.lt.f32.partialorder %v1298, 0.0004427343
        %v1300 = vsel %vm1299, %v1297, %v1294
        %v1301 = vadd.f32 %v1242, 1.0
        %v1302 = vlog2.pop %v1301
        %v1303 = vmul.f32 %v1302, 0.6931472
        %v1304 = vmul.f32 -0.5, %v1242
        %v1305 = vadd.f32 %v1304, 1.0
        %v1306 = vmul.f32 %v1305, %v1242
        %v1307 = vand.u32 2147483647, %v1242
        %vm1308 = vcmp.lt.f32.partialorder %v1307, 0.0004427343
        %v1309 = vsel %vm1308, %v1306, %v1303
        %v1310 = vadd.f32 %v1244, 1.0
        %v1311 = vlog2.pop %v1310
        %v1312 = vmul.f32 %v1311, 0.6931472
        %v1313 = vmul.f32 -0.5, %v1244
        %v1314 = vadd.f32 %v1313, 1.0
        %v1315 = vmul.f32 %v1314, %v1244
        %v1316 = vand.u32 2147483647, %v1244
        %vm1317 = vcmp.lt.f32.partialorder %v1316, 0.0004427343
        %v1318 = vsel %vm1317, %v1315, %v1312
        %v1319 = vadd.f32 %v1246, 1.0
        %v1320 = vlog2.pop %v1319
        %v1321 = vmul.f32 %v1320, 0.6931472
        %v1322 = vmul.f32 -0.5, %v1246
        %v1323 = vadd.f32 %v1322, 1.0
        %v1324 = vmul.f32 %v1323, %v1246
        %v1325 = vand.u32 2147483647, %v1246
        %vm1326 = vcmp.lt.f32.partialorder %v1325, 0.0004427343
        %v1327 = vsel %vm1326, %v1324, %v1321
        %v1328 = vadd.f32 %v1248, 1.0
        %v1329 = vlog2.pop %v1328
        %v1330 = vmul.f32 %v1329, 0.6931472
        %v1331 = vmul.f32 -0.5, %v1248
        %v1332 = vadd.f32 %v1331, 1.0
        %v1333 = vmul.f32 %v1332, %v1248
        %v1334 = vand.u32 2147483647, %v1248
        %vm1335 = vcmp.lt.f32.partialorder %v1334, 0.0004427343
        %v1336 = vsel %vm1335, %v1333, %v1330
        %v1337 = vadd.f32 %v1250, 1.0
        %v1338 = vlog2.pop %v1337
        %v1339 = vmul.f32 %v1338, 0.6931472
        %v1340 = vmul.f32 -0.5, %v1250
        %v1341 = vadd.f32 %v1340, 1.0
        %v1342 = vmul.f32 %v1341, %v1250
        %v1343 = vand.u32 2147483647, %v1250
        %vm1344 = vcmp.lt.f32.partialorder %v1343, 0.0004427343
        %v1345 = vsel %vm1344, %v1342, %v1339
        %v1346 = vadd.f32 %v1252, 1.0
        %v1347 = vlog2.pop %v1346
        %v1348 = vmul.f32 %v1347, 0.6931472
        %v1349 = vmul.f32 -0.5, %v1252
        %v1350 = vadd.f32 %v1349, 1.0
        %v1351 = vmul.f32 %v1350, %v1252
        %v1352 = vand.u32 2147483647, %v1252
        %vm1353 = vcmp.lt.f32.partialorder %v1352, 0.0004427343
        %v1354 = vsel %vm1353, %v1351, %v1348
        %v1355 = vadd.f32 %v1254, 1.0
        %v1356 = vlog2.pop %v1355
        %v1357 = vmul.f32 %v1356, 0.6931472
        %v1358 = vmul.f32 -0.5, %v1254
        %v1359 = vadd.f32 %v1358, 1.0
        %v1360 = vmul.f32 %v1359, %v1254
        %v1361 = vand.u32 2147483647, %v1254
        %vm1362 = vcmp.lt.f32.partialorder %v1361, 0.0004427343
        %v1363 = vsel %vm1362, %v1360, %v1357
        %v1364 = vadd.f32 %v1256, 1.0
        %v1365 = vlog2.pop %v1364
        %v1366 = vmul.f32 %v1365, 0.6931472
        %v1367 = vmul.f32 -0.5, %v1256
        %v1368 = vadd.f32 %v1367, 1.0
        %v1369 = vmul.f32 %v1368, %v1256
        %v1370 = vand.u32 2147483647, %v1256
        %vm1371 = vcmp.lt.f32.partialorder %v1370, 0.0004427343
        %v1372 = vsel %vm1371, %v1369, %v1366
        %v1373 = vadd.f32 %v1258, 1.0
        %v1374 = vlog2.pop %v1373
        %v1375 = vmul.f32 %v1374, 0.6931472
        %v1376 = vmul.f32 -0.5, %v1258
        %v1377 = vadd.f32 %v1376, 1.0
        %v1378 = vmul.f32 %v1377, %v1258
        %v1379 = vand.u32 2147483647, %v1258
        %vm1380 = vcmp.lt.f32.partialorder %v1379, 0.0004427343
        %v1381 = vsel %vm1380, %v1378, %v1375
        %v1382 = vadd.f32 %v1260, 1.0
        %v1383 = vlog2.pop %v1382
        %v1384 = vmul.f32 %v1383, 0.6931472
        %v1385 = vmul.f32 -0.5, %v1260
        %v1386 = vadd.f32 %v1385, 1.0
        %v1387 = vmul.f32 %v1386, %v1260
        %v1388 = vand.u32 2147483647, %v1260
        %vm1389 = vcmp.lt.f32.partialorder %v1388, 0.0004427343
        %v1390 = vsel %vm1389, %v1387, %v1384
        %v1391 = vadd.f32 %v1262, 1.0
        %v1392 = vlog2.pop %v1391
        %v1393 = vmul.f32 %v1392, 0.6931472
        %v1394 = vmul.f32 -0.5, %v1262
        %v1395 = vadd.f32 %v1394, 1.0
        %v1396 = vmul.f32 %v1395, %v1262
        %v1397 = vand.u32 2147483647, %v1262
        %vm1398 = vcmp.lt.f32.partialorder %v1397, 0.0004427343
        %v1399 = vsel %vm1398, %v1396, %v1393
        %v1400 = vadd.f32 %v1264, 1.0
        %v1401 = vlog2.pop %v1400
        %v1402 = vmul.f32 %v1401, 0.6931472
        %v1403 = vmul.f32 -0.5, %v1264
        %v1404 = vadd.f32 %v1403, 1.0
        %v1405 = vmul.f32 %v1404, %v1264
        %v1406 = vand.u32 2147483647, %v1264
        %vm1407 = vcmp.lt.f32.partialorder %v1406, 0.0004427343
        %v1408 = vsel %vm1407, %v1405, %v1402
        %v1409 = vadd.f32 %v1185, %v1273
        %v1410 = vadd.f32 %v1186, %v1282
        %v1411 = vadd.f32 %v1187, %v1291
        %v1412 = vadd.f32 %v1188, %v1300
        %v1413 = vadd.f32 %v1189, %v1309
        %v1414 = vadd.f32 %v1190, %v1318
        %v1415 = vadd.f32 %v1191, %v1327
        %v1416 = vadd.f32 %v1192, %v1336
        %v1417 = vadd.f32 %v1193, %v1345
        %v1418 = vadd.f32 %v1194, %v1354
        %v1419 = vadd.f32 %v1195, %v1363
        %v1420 = vadd.f32 %v1196, %v1372
        %v1421 = vadd.f32 %v1197, %v1381
        %v1422 = vadd.f32 %v1198, %v1390
        %v1423 = vadd.f32 %v1199, %v1399
        %v1424 = vadd.f32 %v1200, %v1408
        %vm1425 = vcmask 130048
        %v1426 = vsel %vm1425, %v1123, %v1409
        %v1427 = vsel %vm1425, %v1126, %v1410
        %v1428 = vsel %vm1425, %v1131, %v1411
        %v1429 = vsel %vm1425, %v1134, %v1412
        %v1430 = vsel %vm1425, %v1139, %v1413
        %v1431 = vsel %vm1425, %v1142, %v1414
        %v1432 = vsel %vm1425, %v1147, %v1415
        %v1433 = vsel %vm1425, %v1150, %v1416
        %v1434 = vsel %vm1425, %v1155, %v1417
        %v1435 = vsel %vm1425, %v1158, %v1418
        %v1436 = vsel %vm1425, %v1163, %v1419
        %v1437 = vsel %vm1425, %v1166, %v1420
        %v1438 = vsel %vm1425, %v1171, %v1421
        %v1439 = vsel %vm1425, %v1174, %v1422
        %v1440 = vsel %vm1425, %v1179, %v1423
        %v1441 = vsel %vm1425, %v1182, %v1424
        %vm1442 = vcmask 261120
        %v1443 = vsel %vm1442, %v1426, 0.0
        %v1444 = vsel %vm1442, %v1427, 0.0
        %v1445 = vsel %vm1442, %v1428, 0.0
        %v1446 = vsel %vm1442, %v1429, 0.0
        %v1447 = vsel %vm1442, %v1430, 0.0
        %v1448 = vsel %vm1442, %v1431, 0.0
        %v1449 = vsel %vm1442, %v1432, 0.0
        %v1450 = vsel %vm1442, %v1433, 0.0
        %v1451 = vsel %vm1442, %v1434, 0.0
        %v1452 = vsel %vm1442, %v1435, 0.0
        %v1453 = vsel %vm1442, %v1436, 0.0
        %v1454 = vsel %vm1442, %v1437, 0.0
        %v1455 = vsel %vm1442, %v1438, 0.0
        %v1456 = vsel %vm1442, %v1439, 0.0
        %v1457 = vsel %vm1442, %v1440, 0.0
        %v1458 = vsel %vm1442, %v1441, 0.0
        %1459 = vst [vmem:[%s483] sm:$0xff] %v1443
        %1460 = vst [vmem:[%s483 + $0x8] sm:$0xff] %v1444
        %1461 = vst [vmem:[%s483 + $0x10] sm:$0xff] %v1445
        %1462 = vst [vmem:[%s483 + $0x18] sm:$0xff] %v1446
        %1463 = vst [vmem:[%s483 + $0x20] sm:$0xff] %v1447
        %1464 = vst [vmem:[%s483 + $0x28] sm:$0xff] %v1448
        %1465 = vst [vmem:[%s483 + $0x30] sm:$0xff] %v1449
        %1466 = vst [vmem:[%s483 + $0x38] sm:$0xff] %v1450
        %1467 = vst [vmem:[%s483 + $0x40] sm:$0xff] %v1451
        %1468 = vst [vmem:[%s483 + $0x48] sm:$0xff] %v1452
        %1469 = vst [vmem:[%s483 + $0x50] sm:$0xff] %v1453
        %1470 = vst [vmem:[%s483 + $0x58] sm:$0xff] %v1454
        %1471 = vst [vmem:[%s483 + $0x60] sm:$0xff] %v1455
        %1472 = vst [vmem:[%s483 + $0x68] sm:$0xff] %v1456
        %1473 = vst [vmem:[%s483 + $0x70] sm:$0xff] %v1457
        %1474 = vst [vmem:[%s483 + $0x78] sm:$0xff] %v1458
        %v1475 = vmax.f32 %v1123, 0.0001
        %v1476 = vmax.f32 %v1126, 0.0001
        %v1477 = vmax.f32 %v1131, 0.0001
        %v1478 = vmax.f32 %v1134, 0.0001
        %v1479 = vmax.f32 %v1139, 0.0001
        %v1480 = vmax.f32 %v1142, 0.0001
        %v1481 = vmax.f32 %v1147, 0.0001
        %v1482 = vmax.f32 %v1150, 0.0001
        %v1483 = vmax.f32 %v1155, 0.0001
        %v1484 = vmax.f32 %v1158, 0.0001
        %v1485 = vmax.f32 %v1163, 0.0001
        %v1486 = vmax.f32 %v1166, 0.0001
        %v1487 = vmax.f32 %v1171, 0.0001
        %v1488 = vmax.f32 %v1174, 0.0001
        %v1489 = vmax.f32 %v1179, 0.0001
        %v1490 = vmax.f32 %v1182, 0.0001
        %v1491 = vmax.f32 %v1409, 0.0001
        %v1492 = vmax.f32 %v1410, 0.0001
        %v1493 = vmax.f32 %v1411, 0.0001
        %v1494 = vmax.f32 %v1412, 0.0001
        %v1495 = vmax.f32 %v1413, 0.0001
        %v1496 = vmax.f32 %v1414, 0.0001
        %v1497 = vmax.f32 %v1415, 0.0001
        %v1498 = vmax.f32 %v1416, 0.0001
        %v1499 = vmax.f32 %v1417, 0.0001
        %v1500 = vmax.f32 %v1418, 0.0001
        %v1501 = vmax.f32 %v1419, 0.0001
        %v1502 = vmax.f32 %v1420, 0.0001
        %v1503 = vmax.f32 %v1421, 0.0001
        %v1504 = vmax.f32 %v1422, 0.0001
        %v1505 = vmax.f32 %v1423, 0.0001
        %v1506 = vmax.f32 %v1424, 0.0001
        %v1507 = vrsqrt.pop %v1491
        %v1508 = vmul.f32 %v1491, %v1507
        %vm1509 = vcmp.eq.f32.partialorder %v1491, inf
        %v1510 = vsel %vm1509, %v1491, %v1508
        %vm1511 = vcmp.eq.f32.partialorder %v1491, 0.0
        %v1512 = vand.u32 %v1491, 2147483648
        %v1513 = vsel %vm1511, %v1512, %v1510
        %v1514 = vrsqrt.pop %v1492
        %v1515 = vmul.f32 %v1492, %v1514
        %vm1516 = vcmp.eq.f32.partialorder %v1492, inf
        %v1517 = vsel %vm1516, %v1492, %v1515
        %vm1518 = vcmp.eq.f32.partialorder %v1492, 0.0
        %v1519 = vand.u32 %v1492, 2147483648
        %v1520 = vsel %vm1518, %v1519, %v1517
        %v1521 = vrsqrt.pop %v1493
        %v1522 = vmul.f32 %v1493, %v1521
        %vm1523 = vcmp.eq.f32.partialorder %v1493, inf
        %v1524 = vsel %vm1523, %v1493, %v1522
        %vm1525 = vcmp.eq.f32.partialorder %v1493, 0.0
        %v1526 = vand.u32 %v1493, 2147483648
        %v1527 = vsel %vm1525, %v1526, %v1524
        %v1528 = vrsqrt.pop %v1494
        %v1529 = vmul.f32 %v1494, %v1528
        %vm1530 = vcmp.eq.f32.partialorder %v1494, inf
        %v1531 = vsel %vm1530, %v1494, %v1529
        %vm1532 = vcmp.eq.f32.partialorder %v1494, 0.0
        %v1533 = vand.u32 %v1494, 2147483648
        %v1534 = vsel %vm1532, %v1533, %v1531
        %v1535 = vrsqrt.pop %v1495
        %v1536 = vmul.f32 %v1495, %v1535
        %vm1537 = vcmp.eq.f32.partialorder %v1495, inf
        %v1538 = vsel %vm1537, %v1495, %v1536
        %vm1539 = vcmp.eq.f32.partialorder %v1495, 0.0
        %v1540 = vand.u32 %v1495, 2147483648
        %v1541 = vsel %vm1539, %v1540, %v1538
        %v1542 = vrsqrt.pop %v1496
        %v1543 = vmul.f32 %v1496, %v1542
        %vm1544 = vcmp.eq.f32.partialorder %v1496, inf
        %v1545 = vsel %vm1544, %v1496, %v1543
        %vm1546 = vcmp.eq.f32.partialorder %v1496, 0.0
        %v1547 = vand.u32 %v1496, 2147483648
        %v1548 = vsel %vm1546, %v1547, %v1545
        %v1549 = vrsqrt.pop %v1497
        %v1550 = vmul.f32 %v1497, %v1549
        %vm1551 = vcmp.eq.f32.partialorder %v1497, inf
        %v1552 = vsel %vm1551, %v1497, %v1550
        %vm1553 = vcmp.eq.f32.partialorder %v1497, 0.0
        %v1554 = vand.u32 %v1497, 2147483648
        %v1555 = vsel %vm1553, %v1554, %v1552
        %v1556 = vrsqrt.pop %v1498
        %v1557 = vmul.f32 %v1498, %v1556
        %vm1558 = vcmp.eq.f32.partialorder %v1498, inf
        %v1559 = vsel %vm1558, %v1498, %v1557
        %vm1560 = vcmp.eq.f32.partialorder %v1498, 0.0
        %v1561 = vand.u32 %v1498, 2147483648
        %v1562 = vsel %vm1560, %v1561, %v1559
        %v1563 = vrsqrt.pop %v1499
        %v1564 = vmul.f32 %v1499, %v1563
        %vm1565 = vcmp.eq.f32.partialorder %v1499, inf
        %v1566 = vsel %vm1565, %v1499, %v1564
        %vm1567 = vcmp.eq.f32.partialorder %v1499, 0.0
        %v1568 = vand.u32 %v1499, 2147483648
        %v1569 = vsel %vm1567, %v1568, %v1566
        %v1570 = vrsqrt.pop %v1500
        %v1571 = vmul.f32 %v1500, %v1570
        %vm1572 = vcmp.eq.f32.partialorder %v1500, inf
        %v1573 = vsel %vm1572, %v1500, %v1571
        %vm1574 = vcmp.eq.f32.partialorder %v1500, 0.0
        %v1575 = vand.u32 %v1500, 2147483648
        %v1576 = vsel %vm1574, %v1575, %v1573
        %v1577 = vrsqrt.pop %v1501
        %v1578 = vmul.f32 %v1501, %v1577
        %vm1579 = vcmp.eq.f32.partialorder %v1501, inf
        %v1580 = vsel %vm1579, %v1501, %v1578
        %vm1581 = vcmp.eq.f32.partialorder %v1501, 0.0
        %v1582 = vand.u32 %v1501, 2147483648
        %v1583 = vsel %vm1581, %v1582, %v1580
        %v1584 = vrsqrt.pop %v1502
        %v1585 = vmul.f32 %v1502, %v1584
        %vm1586 = vcmp.eq.f32.partialorder %v1502, inf
        %v1587 = vsel %vm1586, %v1502, %v1585
        %vm1588 = vcmp.eq.f32.partialorder %v1502, 0.0
        %v1589 = vand.u32 %v1502, 2147483648
        %v1590 = vsel %vm1588, %v1589, %v1587
        %v1591 = vrsqrt.pop %v1503
        %v1592 = vmul.f32 %v1503, %v1591
        %vm1593 = vcmp.eq.f32.partialorder %v1503, inf
        %v1594 = vsel %vm1593, %v1503, %v1592
        %vm1595 = vcmp.eq.f32.partialorder %v1503, 0.0
        %v1596 = vand.u32 %v1503, 2147483648
        %v1597 = vsel %vm1595, %v1596, %v1594
        %v1598 = vrsqrt.pop %v1504
        %v1599 = vmul.f32 %v1504, %v1598
        %vm1600 = vcmp.eq.f32.partialorder %v1504, inf
        %v1601 = vsel %vm1600, %v1504, %v1599
        %vm1602 = vcmp.eq.f32.partialorder %v1504, 0.0
        %v1603 = vand.u32 %v1504, 2147483648
        %v1604 = vsel %vm1602, %v1603, %v1601
        %v1605 = vrsqrt.pop %v1505
        %v1606 = vmul.f32 %v1505, %v1605
        %vm1607 = vcmp.eq.f32.partialorder %v1505, inf
        %v1608 = vsel %vm1607, %v1505, %v1606
        %vm1609 = vcmp.eq.f32.partialorder %v1505, 0.0
        %v1610 = vand.u32 %v1505, 2147483648
        %v1611 = vsel %vm1609, %v1610, %v1608
        %v1612 = vrsqrt.pop %v1506
        %v1613 = vmul.f32 %v1506, %v1612
        %vm1614 = vcmp.eq.f32.partialorder %v1506, inf
        %v1615 = vsel %vm1614, %v1506, %v1613
        %vm1616 = vcmp.eq.f32.partialorder %v1506, 0.0
        %v1617 = vand.u32 %v1506, 2147483648
        %v1618 = vsel %vm1616, %v1617, %v1615
        %v1619 = vld [vmem:[%s431] sm:$0xff]
        %v1620 = vld [vmem:[%s431 + $0x8] sm:$0xff]
        %v1621 = vld [vmem:[%s431 + $0x10] sm:$0xff]
        %v1622 = vld [vmem:[%s431 + $0x18] sm:$0xff]
        %v1623 = vld [vmem:[%s431 + $0x20] sm:$0xff]
        %v1624 = vld [vmem:[%s431 + $0x28] sm:$0xff]
        %v1625 = vld [vmem:[%s431 + $0x30] sm:$0xff]
        %v1626 = vld [vmem:[%s431 + $0x38] sm:$0xff]
        %v1627 = vld [vmem:[%s431 + $0x40] sm:$0xff]
        %v1628 = vld [vmem:[%s431 + $0x48] sm:$0xff]
        %v1629 = vld [vmem:[%s431 + $0x50] sm:$0xff]
        %v1630 = vld [vmem:[%s431 + $0x58] sm:$0xff]
        %v1631 = vld [vmem:[%s431 + $0x60] sm:$0xff]
        %v1632 = vld [vmem:[%s431 + $0x68] sm:$0xff]
        %v1633 = vld [vmem:[%s431 + $0x70] sm:$0xff]
        %v1634 = vld [vmem:[%s431 + $0x78] sm:$0xff]
        %1651 = vrot.lane.b32.xlu0 %v1619, 16
        %v1652 = vpop.permute.xlu0 %1651
        %1653 = vrot.lane.b32.xlu0 %v1620, 16
        %v1654 = vpop.permute.xlu0 %1653
        %1655 = vrot.lane.b32.xlu0 %v1621, 16
        %v1656 = vpop.permute.xlu0 %1655
        %1657 = vrot.lane.b32.xlu0 %v1622, 16
        %v1658 = vpop.permute.xlu0 %1657
        %1659 = vrot.lane.b32.xlu0 %v1623, 16
        %v1660 = vpop.permute.xlu0 %1659
        %1661 = vrot.lane.b32.xlu0 %v1624, 16
        %v1662 = vpop.permute.xlu0 %1661
        %1663 = vrot.lane.b32.xlu0 %v1625, 16
        %v1664 = vpop.permute.xlu0 %1663
        %1665 = vrot.lane.b32.xlu0 %v1626, 16
        %v1666 = vpop.permute.xlu0 %1665
        %1667 = vrot.lane.b32.xlu0 %v1627, 16
        %v1668 = vpop.permute.xlu0 %1667
        %1669 = vrot.lane.b32.xlu0 %v1628, 16
        %v1670 = vpop.permute.xlu0 %1669
        %1671 = vrot.lane.b32.xlu0 %v1629, 16
        %v1672 = vpop.permute.xlu0 %1671
        %1673 = vrot.lane.b32.xlu0 %v1630, 16
        %v1674 = vpop.permute.xlu0 %1673
        %1675 = vrot.lane.b32.xlu0 %v1631, 16
        %v1676 = vpop.permute.xlu0 %1675
        %1677 = vrot.lane.b32.xlu0 %v1632, 16
        %v1678 = vpop.permute.xlu0 %1677
        %1679 = vrot.lane.b32.xlu0 %v1633, 16
        %v1680 = vpop.permute.xlu0 %1679
        %1681 = vrot.lane.b32.xlu0 %v1634, 16
        %v1682 = vpop.permute.xlu0 %1681
        %v1699 = vmul.f32 %v1513, %v1652
        %v1700 = vmul.f32 %v1520, %v1654
        %v1701 = vmul.f32 %v1527, %v1656
        %v1702 = vmul.f32 %v1534, %v1658
        %v1703 = vmul.f32 %v1541, %v1660
        %v1704 = vmul.f32 %v1548, %v1662
        %v1705 = vmul.f32 %v1555, %v1664
        %v1706 = vmul.f32 %v1562, %v1666
        %v1707 = vmul.f32 %v1569, %v1668
        %v1708 = vmul.f32 %v1576, %v1670
        %v1709 = vmul.f32 %v1583, %v1672
        %v1710 = vmul.f32 %v1590, %v1674
        %v1711 = vmul.f32 %v1597, %v1676
        %v1712 = vmul.f32 %v1604, %v1678
        %v1713 = vmul.f32 %v1611, %v1680
        %v1714 = vmul.f32 %v1618, %v1682
        %1731 = vrot.lane.b32.xlu0 %v1699, 112
        %v1732 = vpop.permute.xlu0 %1731
        %1733 = vrot.lane.b32.xlu0 %v1700, 112
        %v1734 = vpop.permute.xlu0 %1733
        %1735 = vrot.lane.b32.xlu0 %v1701, 112
        %v1736 = vpop.permute.xlu0 %1735
        %1737 = vrot.lane.b32.xlu0 %v1702, 112
        %v1738 = vpop.permute.xlu0 %1737
        %1739 = vrot.lane.b32.xlu0 %v1703, 112
        %v1740 = vpop.permute.xlu0 %1739
        %1741 = vrot.lane.b32.xlu0 %v1704, 112
        %v1742 = vpop.permute.xlu0 %1741
        %1743 = vrot.lane.b32.xlu0 %v1705, 112
        %v1744 = vpop.permute.xlu0 %1743
        %1745 = vrot.lane.b32.xlu0 %v1706, 112
        %v1746 = vpop.permute.xlu0 %1745
        %1747 = vrot.lane.b32.xlu0 %v1707, 112
        %v1748 = vpop.permute.xlu0 %1747
        %1749 = vrot.lane.b32.xlu0 %v1708, 112
        %v1750 = vpop.permute.xlu0 %1749
        %1751 = vrot.lane.b32.xlu0 %v1709, 112
        %v1752 = vpop.permute.xlu0 %1751
        %1753 = vrot.lane.b32.xlu0 %v1710, 112
        %v1754 = vpop.permute.xlu0 %1753
        %1755 = vrot.lane.b32.xlu0 %v1711, 112
        %v1756 = vpop.permute.xlu0 %1755
        %1757 = vrot.lane.b32.xlu0 %v1712, 112
        %v1758 = vpop.permute.xlu0 %1757
        %1759 = vrot.lane.b32.xlu0 %v1713, 112
        %v1760 = vpop.permute.xlu0 %1759
        %1761 = vrot.lane.b32.xlu0 %v1714, 112
        %v1762 = vpop.permute.xlu0 %1761
        %v1779 = vadd.f32 %v1475, %v1732
        %v1780 = vadd.f32 %v1476, %v1734
        %v1781 = vadd.f32 %v1477, %v1736
        %v1782 = vadd.f32 %v1478, %v1738
        %v1783 = vadd.f32 %v1479, %v1740
        %v1784 = vadd.f32 %v1480, %v1742
        %v1785 = vadd.f32 %v1481, %v1744
        %v1786 = vadd.f32 %v1482, %v1746
        %v1787 = vadd.f32 %v1483, %v1748
        %v1788 = vadd.f32 %v1484, %v1750
        %v1789 = vadd.f32 %v1485, %v1752
        %v1790 = vadd.f32 %v1486, %v1754
        %v1791 = vadd.f32 %v1487, %v1756
        %v1792 = vadd.f32 %v1488, %v1758
        %v1793 = vadd.f32 %v1489, %v1760
        %v1794 = vadd.f32 %v1490, %v1762
        %v1795 = vsel %vm1425, %v1779, 0.0
        %1796 = vadd.xlane.f32.xlu0 %v1795
        %v1797 = vpop.xlane.xlu0 %1796
        %v1798 = vsel %vm1425, %v1780, 0.0
        %1799 = vadd.xlane.f32.xlu0 %v1798
        %v1800 = vpop.xlane.xlu0 %1799
        %v1801 = vsel %vm1425, %v1781, 0.0
        %1802 = vadd.xlane.f32.xlu0 %v1801
        %v1803 = vpop.xlane.xlu0 %1802
        %v1804 = vsel %vm1425, %v1782, 0.0
        %1805 = vadd.xlane.f32.xlu0 %v1804
        %v1806 = vpop.xlane.xlu0 %1805
        %v1807 = vsel %vm1425, %v1783, 0.0
        %1808 = vadd.xlane.f32.xlu0 %v1807
        %v1809 = vpop.xlane.xlu0 %1808
        %v1810 = vsel %vm1425, %v1784, 0.0
        %1811 = vadd.xlane.f32.xlu0 %v1810
        %v1812 = vpop.xlane.xlu0 %1811
        %v1813 = vsel %vm1425, %v1785, 0.0
        %1814 = vadd.xlane.f32.xlu0 %v1813
        %v1815 = vpop.xlane.xlu0 %1814
        %v1816 = vsel %vm1425, %v1786, 0.0
        %1817 = vadd.xlane.f32.xlu0 %v1816
        %v1818 = vpop.xlane.xlu0 %1817
        %v1819 = vsel %vm1425, %v1787, 0.0
        %1820 = vadd.xlane.f32.xlu0 %v1819
        %v1821 = vpop.xlane.xlu0 %1820
        %v1822 = vsel %vm1425, %v1788, 0.0
        %1823 = vadd.xlane.f32.xlu0 %v1822
        %v1824 = vpop.xlane.xlu0 %1823
        %v1825 = vsel %vm1425, %v1789, 0.0
        %1826 = vadd.xlane.f32.xlu0 %v1825
        %v1827 = vpop.xlane.xlu0 %1826
        %v1828 = vsel %vm1425, %v1790, 0.0
        %1829 = vadd.xlane.f32.xlu0 %v1828
        %v1830 = vpop.xlane.xlu0 %1829
        %v1831 = vsel %vm1425, %v1791, 0.0
        %1832 = vadd.xlane.f32.xlu0 %v1831
        %v1833 = vpop.xlane.xlu0 %1832
        %v1834 = vsel %vm1425, %v1792, 0.0
        %1835 = vadd.xlane.f32.xlu0 %v1834
        %v1836 = vpop.xlane.xlu0 %1835
        %v1837 = vsel %vm1425, %v1793, 0.0
        %1838 = vadd.xlane.f32.xlu0 %v1837
        %v1839 = vpop.xlane.xlu0 %1838
        %v1840 = vsel %vm1425, %v1794, 0.0
        %1841 = vadd.xlane.f32.xlu0 %v1840
        %v1842 = vpop.xlane.xlu0 %1841
        %v1843 = vrcp.pop %v1797
        %v1844 = vrcp.pop %v1800
        %v1845 = vrcp.pop %v1803
        %v1846 = vrcp.pop %v1806
        %v1847 = vrcp.pop %v1809
        %v1848 = vrcp.pop %v1812
        %v1849 = vrcp.pop %v1815
        %v1850 = vrcp.pop %v1818
        %v1851 = vrcp.pop %v1821
        %v1852 = vrcp.pop %v1824
        %v1853 = vrcp.pop %v1827
        %v1854 = vrcp.pop %v1830
        %v1855 = vrcp.pop %v1833
        %v1856 = vrcp.pop %v1836
        %v1857 = vrcp.pop %v1839
        %v1858 = vrcp.pop %v1842
        %v1859 = vmul.f32 %v1779, %v1843
        %v1860 = vmul.f32 %v1780, %v1844
        %v1861 = vmul.f32 %v1781, %v1845
        %v1862 = vmul.f32 %v1782, %v1846
        %v1863 = vmul.f32 %v1783, %v1847
        %v1864 = vmul.f32 %v1784, %v1848
        %v1865 = vmul.f32 %v1785, %v1849
        %v1866 = vmul.f32 %v1786, %v1850
        %v1867 = vmul.f32 %v1787, %v1851
        %v1868 = vmul.f32 %v1788, %v1852
        %v1869 = vmul.f32 %v1789, %v1853
        %v1870 = vmul.f32 %v1790, %v1854
        %v1871 = vmul.f32 %v1791, %v1855
        %v1872 = vmul.f32 %v1792, %v1856
        %v1873 = vmul.f32 %v1793, %v1857
        %v1874 = vmul.f32 %v1794, %v1858
        %v1875 = vsub.f32 1.0, %v1859
        %v1876 = vsub.f32 1.0, %v1860
        %v1877 = vsub.f32 1.0, %v1861
        %v1878 = vsub.f32 1.0, %v1862
        %v1879 = vsub.f32 1.0, %v1863
        %v1880 = vsub.f32 1.0, %v1864
        %v1881 = vsub.f32 1.0, %v1865
        %v1882 = vsub.f32 1.0, %v1866
        %v1883 = vsub.f32 1.0, %v1867
        %v1884 = vsub.f32 1.0, %v1868
        %v1885 = vsub.f32 1.0, %v1869
        %v1886 = vsub.f32 1.0, %v1870
        %v1887 = vsub.f32 1.0, %v1871
        %v1888 = vsub.f32 1.0, %v1872
        %v1889 = vsub.f32 1.0, %v1873
        %v1890 = vsub.f32 1.0, %v1874
        %1907 = vrot.lane.b32.xlu0 %v1875, 1
        %v1908 = vpop.permute.xlu0 %1907
        %1909 = vrot.lane.b32.xlu0 %v1876, 1
        %v1910 = vpop.permute.xlu0 %1909
        %1911 = vrot.lane.b32.xlu0 %v1877, 1
        %v1912 = vpop.permute.xlu0 %1911
        %1913 = vrot.lane.b32.xlu0 %v1878, 1
        %v1914 = vpop.permute.xlu0 %1913
        %1915 = vrot.lane.b32.xlu0 %v1879, 1
        %v1916 = vpop.permute.xlu0 %1915
        %1917 = vrot.lane.b32.xlu0 %v1880, 1
        %v1918 = vpop.permute.xlu0 %1917
        %1919 = vrot.lane.b32.xlu0 %v1881, 1
        %v1920 = vpop.permute.xlu0 %1919
        %1921 = vrot.lane.b32.xlu0 %v1882, 1
        %v1922 = vpop.permute.xlu0 %1921
        %1923 = vrot.lane.b32.xlu0 %v1883, 1
        %v1924 = vpop.permute.xlu0 %1923
        %1925 = vrot.lane.b32.xlu0 %v1884, 1
        %v1926 = vpop.permute.xlu0 %1925
        %1927 = vrot.lane.b32.xlu0 %v1885, 1
        %v1928 = vpop.permute.xlu0 %1927
        %1929 = vrot.lane.b32.xlu0 %v1886, 1
        %v1930 = vpop.permute.xlu0 %1929
        %1931 = vrot.lane.b32.xlu0 %v1887, 1
        %v1932 = vpop.permute.xlu0 %1931
        %1933 = vrot.lane.b32.xlu0 %v1888, 1
        %v1934 = vpop.permute.xlu0 %1933
        %1935 = vrot.lane.b32.xlu0 %v1889, 1
        %v1936 = vpop.permute.xlu0 %1935
        %1937 = vrot.lane.b32.xlu0 %v1890, 1
        %v1938 = vpop.permute.xlu0 %1937
        %vm1955 = vcmask 7168
        %v1956 = vsel %vm1955, 1.0, %v1908
        %v1957 = vsel %vm1955, 1.0, %v1910
        %v1958 = vsel %vm1955, 1.0, %v1912
        %v1959 = vsel %vm1955, 1.0, %v1914
        %v1960 = vsel %vm1955, 1.0, %v1916
        %v1961 = vsel %vm1955, 1.0, %v1918
        %v1962 = vsel %vm1955, 1.0, %v1920
        %v1963 = vsel %vm1955, 1.0, %v1922
        %v1964 = vsel %vm1955, 1.0, %v1924
        %v1965 = vsel %vm1955, 1.0, %v1926
        %v1966 = vsel %vm1955, 1.0, %v1928
        %v1967 = vsel %vm1955, 1.0, %v1930
        %v1968 = vsel %vm1955, 1.0, %v1932
        %v1969 = vsel %vm1955, 1.0, %v1934
        %v1970 = vsel %vm1955, 1.0, %v1936
        %v1971 = vsel %vm1955, 1.0, %v1938
        %1988 = vrot.lane.b32.xlu0 %v1956, 1
        %v1989 = vpop.permute.xlu0 %1988
        %1990 = vrot.lane.b32.xlu0 %v1957, 1
        %v1991 = vpop.permute.xlu0 %1990
        %1992 = vrot.lane.b32.xlu0 %v1958, 1
        %v1993 = vpop.permute.xlu0 %1992
        %1994 = vrot.lane.b32.xlu0 %v1959, 1
        %v1995 = vpop.permute.xlu0 %1994
        %1996 = vrot.lane.b32.xlu0 %v1960, 1
        %v1997 = vpop.permute.xlu0 %1996
        %1998 = vrot.lane.b32.xlu0 %v1961, 1
        %v1999 = vpop.permute.xlu0 %1998
        %2000 = vrot.lane.b32.xlu0 %v1962, 1
        %v2001 = vpop.permute.xlu0 %2000
        %2002 = vrot.lane.b32.xlu0 %v1963, 1
        %v2003 = vpop.permute.xlu0 %2002
        %2004 = vrot.lane.b32.xlu0 %v1964, 1
        %v2005 = vpop.permute.xlu0 %2004
        %2006 = vrot.lane.b32.xlu0 %v1965, 1
        %v2007 = vpop.permute.xlu0 %2006
        %2008 = vrot.lane.b32.xlu0 %v1966, 1
        %v2009 = vpop.permute.xlu0 %2008
        %2010 = vrot.lane.b32.xlu0 %v1967, 1
        %v2011 = vpop.permute.xlu0 %2010
        %2012 = vrot.lane.b32.xlu0 %v1968, 1
        %v2013 = vpop.permute.xlu0 %2012
        %2014 = vrot.lane.b32.xlu0 %v1969, 1
        %v2015 = vpop.permute.xlu0 %2014
        %2016 = vrot.lane.b32.xlu0 %v1970, 1
        %v2017 = vpop.permute.xlu0 %2016
        %2018 = vrot.lane.b32.xlu0 %v1971, 1
        %v2019 = vpop.permute.xlu0 %2018
        %v2036 = vsel %vm1955, 1.0, %v1989
        %v2037 = vsel %vm1955, 1.0, %v1991
        %v2038 = vsel %vm1955, 1.0, %v1993
        %v2039 = vsel %vm1955, 1.0, %v1995
        %v2040 = vsel %vm1955, 1.0, %v1997
        %v2041 = vsel %vm1955, 1.0, %v1999
        %v2042 = vsel %vm1955, 1.0, %v2001
        %v2043 = vsel %vm1955, 1.0, %v2003
        %v2044 = vsel %vm1955, 1.0, %v2005
        %v2045 = vsel %vm1955, 1.0, %v2007
        %v2046 = vsel %vm1955, 1.0, %v2009
        %v2047 = vsel %vm1955, 1.0, %v2011
        %v2048 = vsel %vm1955, 1.0, %v2013
        %v2049 = vsel %vm1955, 1.0, %v2015
        %v2050 = vsel %vm1955, 1.0, %v2017
        %v2051 = vsel %vm1955, 1.0, %v2019
        %v2052 = vmul.f32 %v1956, %v2036
        %v2053 = vmul.f32 %v1957, %v2037
        %v2054 = vmul.f32 %v1958, %v2038
        %v2055 = vmul.f32 %v1959, %v2039
        %v2056 = vmul.f32 %v1960, %v2040
        %v2057 = vmul.f32 %v1961, %v2041
        %v2058 = vmul.f32 %v1962, %v2042
        %v2059 = vmul.f32 %v1963, %v2043
        %v2060 = vmul.f32 %v1964, %v2044
        %v2061 = vmul.f32 %v1965, %v2045
        %v2062 = vmul.f32 %v1966, %v2046
        %v2063 = vmul.f32 %v1967, %v2047
        %v2064 = vmul.f32 %v1968, %v2048
        %v2065 = vmul.f32 %v1969, %v2049
        %v2066 = vmul.f32 %v1970, %v2050
        %v2067 = vmul.f32 %v1971, %v2051
        %2084 = vrot.lane.b32.xlu0 %v2052, 2
        %v2085 = vpop.permute.xlu0 %2084
        %2086 = vrot.lane.b32.xlu0 %v2053, 2
        %v2087 = vpop.permute.xlu0 %2086
        %2088 = vrot.lane.b32.xlu0 %v2054, 2
        %v2089 = vpop.permute.xlu0 %2088
        %2090 = vrot.lane.b32.xlu0 %v2055, 2
        %v2091 = vpop.permute.xlu0 %2090
        %2092 = vrot.lane.b32.xlu0 %v2056, 2
        %v2093 = vpop.permute.xlu0 %2092
        %2094 = vrot.lane.b32.xlu0 %v2057, 2
        %v2095 = vpop.permute.xlu0 %2094
        %2096 = vrot.lane.b32.xlu0 %v2058, 2
        %v2097 = vpop.permute.xlu0 %2096
        %2098 = vrot.lane.b32.xlu0 %v2059, 2
        %v2099 = vpop.permute.xlu0 %2098
        %2100 = vrot.lane.b32.xlu0 %v2060, 2
        %v2101 = vpop.permute.xlu0 %2100
        %2102 = vrot.lane.b32.xlu0 %v2061, 2
        %v2103 = vpop.permute.xlu0 %2102
        %2104 = vrot.lane.b32.xlu0 %v2062, 2
        %v2105 = vpop.permute.xlu0 %2104
        %2106 = vrot.lane.b32.xlu0 %v2063, 2
        %v2107 = vpop.permute.xlu0 %2106
        %2108 = vrot.lane.b32.xlu0 %v2064, 2
        %v2109 = vpop.permute.xlu0 %2108
        %2110 = vrot.lane.b32.xlu0 %v2065, 2
        %v2111 = vpop.permute.xlu0 %2110
        %2112 = vrot.lane.b32.xlu0 %v2066, 2
        %v2113 = vpop.permute.xlu0 %2112
        %2114 = vrot.lane.b32.xlu0 %v2067, 2
        %v2115 = vpop.permute.xlu0 %2114
        %vm2132 = vcmask 15360
        %v2133 = vsel %vm2132, 1.0, %v2085
        %v2134 = vsel %vm2132, 1.0, %v2087
        %v2135 = vsel %vm2132, 1.0, %v2089
        %v2136 = vsel %vm2132, 1.0, %v2091
        %v2137 = vsel %vm2132, 1.0, %v2093
        %v2138 = vsel %vm2132, 1.0, %v2095
        %v2139 = vsel %vm2132, 1.0, %v2097
        %v2140 = vsel %vm2132, 1.0, %v2099
        %v2141 = vsel %vm2132, 1.0, %v2101
        %v2142 = vsel %vm2132, 1.0, %v2103
        %v2143 = vsel %vm2132, 1.0, %v2105
        %v2144 = vsel %vm2132, 1.0, %v2107
        %v2145 = vsel %vm2132, 1.0, %v2109
        %v2146 = vsel %vm2132, 1.0, %v2111
        %v2147 = vsel %vm2132, 1.0, %v2113
        %v2148 = vsel %vm2132, 1.0, %v2115
        %v2149 = vmul.f32 %v2052, %v2133
        %v2150 = vmul.f32 %v2053, %v2134
        %v2151 = vmul.f32 %v2054, %v2135
        %v2152 = vmul.f32 %v2055, %v2136
        %v2153 = vmul.f32 %v2056, %v2137
        %v2154 = vmul.f32 %v2057, %v2138
        %v2155 = vmul.f32 %v2058, %v2139
        %v2156 = vmul.f32 %v2059, %v2140
        %v2157 = vmul.f32 %v2060, %v2141
        %v2158 = vmul.f32 %v2061, %v2142
        %v2159 = vmul.f32 %v2062, %v2143
        %v2160 = vmul.f32 %v2063, %v2144
        %v2161 = vmul.f32 %v2064, %v2145
        %v2162 = vmul.f32 %v2065, %v2146
        %v2163 = vmul.f32 %v2066, %v2147
        %v2164 = vmul.f32 %v2067, %v2148
        %2181 = vrot.lane.b32.xlu0 %v2149, 4
        %v2182 = vpop.permute.xlu0 %2181
        %2183 = vrot.lane.b32.xlu0 %v2150, 4
        %v2184 = vpop.permute.xlu0 %2183
        %2185 = vrot.lane.b32.xlu0 %v2151, 4
        %v2186 = vpop.permute.xlu0 %2185
        %2187 = vrot.lane.b32.xlu0 %v2152, 4
        %v2188 = vpop.permute.xlu0 %2187
        %2189 = vrot.lane.b32.xlu0 %v2153, 4
        %v2190 = vpop.permute.xlu0 %2189
        %2191 = vrot.lane.b32.xlu0 %v2154, 4
        %v2192 = vpop.permute.xlu0 %2191
        %2193 = vrot.lane.b32.xlu0 %v2155, 4
        %v2194 = vpop.permute.xlu0 %2193
        %2195 = vrot.lane.b32.xlu0 %v2156, 4
        %v2196 = vpop.permute.xlu0 %2195
        %2197 = vrot.lane.b32.xlu0 %v2157, 4
        %v2198 = vpop.permute.xlu0 %2197
        %2199 = vrot.lane.b32.xlu0 %v2158, 4
        %v2200 = vpop.permute.xlu0 %2199
        %2201 = vrot.lane.b32.xlu0 %v2159, 4
        %v2202 = vpop.permute.xlu0 %2201
        %2203 = vrot.lane.b32.xlu0 %v2160, 4
        %v2204 = vpop.permute.xlu0 %2203
        %2205 = vrot.lane.b32.xlu0 %v2161, 4
        %v2206 = vpop.permute.xlu0 %2205
        %2207 = vrot.lane.b32.xlu0 %v2162, 4
        %v2208 = vpop.permute.xlu0 %2207
        %2209 = vrot.lane.b32.xlu0 %v2163, 4
        %v2210 = vpop.permute.xlu0 %2209
        %2211 = vrot.lane.b32.xlu0 %v2164, 4
        %v2212 = vpop.permute.xlu0 %2211
        %vm2229 = vcmask 31744
        %v2230 = vsel %vm2229, 1.0, %v2182
        %v2231 = vsel %vm2229, 1.0, %v2184
        %v2232 = vsel %vm2229, 1.0, %v2186
        %v2233 = vsel %vm2229, 1.0, %v2188
        %v2234 = vsel %vm2229, 1.0, %v2190
        %v2235 = vsel %vm2229, 1.0, %v2192
        %v2236 = vsel %vm2229, 1.0, %v2194
        %v2237 = vsel %vm2229, 1.0, %v2196
        %v2238 = vsel %vm2229, 1.0, %v2198
        %v2239 = vsel %vm2229, 1.0, %v2200
        %v2240 = vsel %vm2229, 1.0, %v2202
        %v2241 = vsel %vm2229, 1.0, %v2204
        %v2242 = vsel %vm2229, 1.0, %v2206
        %v2243 = vsel %vm2229, 1.0, %v2208
        %v2244 = vsel %vm2229, 1.0, %v2210
        %v2245 = vsel %vm2229, 1.0, %v2212
        %v2246 = vmul.f32 %v2149, %v2230
        %v2247 = vmul.f32 %v2150, %v2231
        %v2248 = vmul.f32 %v2151, %v2232
        %v2249 = vmul.f32 %v2152, %v2233
        %v2250 = vmul.f32 %v2153, %v2234
        %v2251 = vmul.f32 %v2154, %v2235
        %v2252 = vmul.f32 %v2155, %v2236
        %v2253 = vmul.f32 %v2156, %v2237
        %v2254 = vmul.f32 %v2157, %v2238
        %v2255 = vmul.f32 %v2158, %v2239
        %v2256 = vmul.f32 %v2159, %v2240
        %v2257 = vmul.f32 %v2160, %v2241
        %v2258 = vmul.f32 %v2161, %v2242
        %v2259 = vmul.f32 %v2162, %v2243
        %v2260 = vmul.f32 %v2163, %v2244
        %v2261 = vmul.f32 %v2164, %v2245
        %2278 = vrot.lane.b32.xlu0 %v2246, 8
        %v2279 = vpop.permute.xlu0 %2278
        %2280 = vrot.lane.b32.xlu0 %v2247, 8
        %v2281 = vpop.permute.xlu0 %2280
        %2282 = vrot.lane.b32.xlu0 %v2248, 8
        %v2283 = vpop.permute.xlu0 %2282
        %2284 = vrot.lane.b32.xlu0 %v2249, 8
        %v2285 = vpop.permute.xlu0 %2284
        %2286 = vrot.lane.b32.xlu0 %v2250, 8
        %v2287 = vpop.permute.xlu0 %2286
        %2288 = vrot.lane.b32.xlu0 %v2251, 8
        %v2289 = vpop.permute.xlu0 %2288
        %2290 = vrot.lane.b32.xlu0 %v2252, 8
        %v2291 = vpop.permute.xlu0 %2290
        %2292 = vrot.lane.b32.xlu0 %v2253, 8
        %v2293 = vpop.permute.xlu0 %2292
        %2294 = vrot.lane.b32.xlu0 %v2254, 8
        %v2295 = vpop.permute.xlu0 %2294
        %2296 = vrot.lane.b32.xlu0 %v2255, 8
        %v2297 = vpop.permute.xlu0 %2296
        %2298 = vrot.lane.b32.xlu0 %v2256, 8
        %v2299 = vpop.permute.xlu0 %2298
        %2300 = vrot.lane.b32.xlu0 %v2257, 8
        %v2301 = vpop.permute.xlu0 %2300
        %2302 = vrot.lane.b32.xlu0 %v2258, 8
        %v2303 = vpop.permute.xlu0 %2302
        %2304 = vrot.lane.b32.xlu0 %v2259, 8
        %v2305 = vpop.permute.xlu0 %2304
        %2306 = vrot.lane.b32.xlu0 %v2260, 8
        %v2307 = vpop.permute.xlu0 %2306
        %2308 = vrot.lane.b32.xlu0 %v2261, 8
        %v2309 = vpop.permute.xlu0 %2308
        %vm2326 = vcmask 64512
        %v2327 = vsel %vm2326, 1.0, %v2279
        %v2328 = vsel %vm2326, 1.0, %v2281
        %v2329 = vsel %vm2326, 1.0, %v2283
        %v2330 = vsel %vm2326, 1.0, %v2285
        %v2331 = vsel %vm2326, 1.0, %v2287
        %v2332 = vsel %vm2326, 1.0, %v2289
        %v2333 = vsel %vm2326, 1.0, %v2291
        %v2334 = vsel %vm2326, 1.0, %v2293
        %v2335 = vsel %vm2326, 1.0, %v2295
        %v2336 = vsel %vm2326, 1.0, %v2297
        %v2337 = vsel %vm2326, 1.0, %v2299
        %v2338 = vsel %vm2326, 1.0, %v2301
        %v2339 = vsel %vm2326, 1.0, %v2303
        %v2340 = vsel %vm2326, 1.0, %v2305
        %v2341 = vsel %vm2326, 1.0, %v2307
        %v2342 = vsel %vm2326, 1.0, %v2309
        %v2343 = vmul.f32 %v2246, %v2327
        %v2344 = vmul.f32 %v2247, %v2328
        %v2345 = vmul.f32 %v2248, %v2329
        %v2346 = vmul.f32 %v2249, %v2330
        %v2347 = vmul.f32 %v2250, %v2331
        %v2348 = vmul.f32 %v2251, %v2332
        %v2349 = vmul.f32 %v2252, %v2333
        %v2350 = vmul.f32 %v2253, %v2334
        %v2351 = vmul.f32 %v2254, %v2335
        %v2352 = vmul.f32 %v2255, %v2336
        %v2353 = vmul.f32 %v2256, %v2337
        %v2354 = vmul.f32 %v2257, %v2338
        %v2355 = vmul.f32 %v2258, %v2339
        %v2356 = vmul.f32 %v2259, %v2340
        %v2357 = vmul.f32 %v2260, %v2341
        %v2358 = vmul.f32 %v2261, %v2342
        %v2359 = vmul.f32 %v1859, %v2343
        %v2360 = vmul.f32 %v1860, %v2344
        %v2361 = vmul.f32 %v1861, %v2345
        %v2362 = vmul.f32 %v1862, %v2346
        %v2363 = vmul.f32 %v1863, %v2347
        %v2364 = vmul.f32 %v1864, %v2348
        %v2365 = vmul.f32 %v1865, %v2349
        %v2366 = vmul.f32 %v1866, %v2350
        %v2367 = vmul.f32 %v1867, %v2351
        %v2368 = vmul.f32 %v1868, %v2352
        %v2369 = vmul.f32 %v1869, %v2353
        %v2370 = vmul.f32 %v1870, %v2354
        %v2371 = vmul.f32 %v1871, %v2355
        %v2372 = vmul.f32 %v1872, %v2356
        %v2373 = vmul.f32 %v1873, %v2357
        %v2374 = vmul.f32 %v1874, %v2358
        %v2375 = vpack.c.bf16 %v2360, %v2359
        %v2376 = vpack.c.bf16 %v2362, %v2361
        %v2377 = vpack.c.bf16 %v2364, %v2363
        %v2378 = vpack.c.bf16 %v2366, %v2365
        %v2379 = vpack.c.bf16 %v2368, %v2367
        %v2380 = vpack.c.bf16 %v2370, %v2369
        %v2381 = vpack.c.bf16 %v2372, %v2371
        %v2382 = vpack.c.bf16 %v2374, %v2373
        %v2383 = vld [vmem:[#allocation13] sm:$0xff]
        %v2384 = vld [vmem:[#allocation13 + $0x8] sm:$0xff]
        %v2385 = vld [vmem:[#allocation14] sm:$0x3]
        %v2387 = vlaneseq
        %v2388 = vshrl.u32 %v2387, 7
        %v2389 = vsub.s32 0, %v2388
        %v2390 = vrot.slane %v2385, %v2389
        %v2391 = vlaneseq
        %v2392 = vshrl.u32 %v2391, 7
        %v2393 = vsub.s32 1, %v2392
        %v2394 = vrot.slane %v2385, %v2393
        %v2399 = vunpack.c.l.b16 %v2383
        %v2400 = vunpack.c.h.b16 %v2383
        %v2401 = vunpack.c.l.b16 %v2384
        %v2402 = vunpack.c.h.b16 %v2384
        %v2403 = vpack.c.b16 %v2401, %v2399
        %v2404 = vpack.c.b16 %v2402, %v2400
        %v2408 = vsel %vm1425, %v2375, 0
        %v2411 = vsel %vm1425, %v2376, 0
        %v2414 = vsel %vm1425, %v2377, 0
        %v2417 = vsel %vm1425, %v2378, 0
        %v2420 = vsel %vm1425, %v2379, 0
        %v2423 = vsel %vm1425, %v2380, 0
        %v2426 = vsel %vm1425, %v2381, 0
        %v2429 = vsel %vm1425, %v2382, 0
        %2431 = vmatprep.subr.bf16.mxu0 %v2404
        %2432 = vmatpush1.bf16.msra.mxu0 %v2403
        %2433 = vmatprep.subr.bf16.mxu0 0
        %2434 = vmatpush1.bf16.msra.mxu0 0
        %2435 = vmatprep.subr.bf16.mxu0 0
        %2436 = vmatpush1.bf16.msra.mxu0 0
        %2437 = vmatprep.subr.bf16.mxu0 0
        %2438 = vmatpush1.bf16.msra.mxu0 0
        %2439 = vmatprep.subr.bf16.mxu0 0
        %2440 = vmatpush1.bf16.msra.mxu0 0
        %2441 = vmatprep.subr.bf16.mxu0 0
        %2442 = vmatpush1.bf16.msra.mxu0 0
        %2443 = vmatprep.subr.bf16.mxu0 0
        %2444 = vmatpush1.bf16.msra.mxu0 0
        %2445 = vmatprep.subr.bf16.mxu0 0
        %2446 = vmatpush1.bf16.msra.mxu0 0
        %2447 = vmatprep.subr.bf16.mxu0 0
        %2448 = vmatpush1.bf16.msra.mxu0 0
        %2449 = vmatprep.subr.bf16.mxu0 0
        %2450 = vmatpush1.bf16.msra.mxu0 0
        %2451 = vmatprep.subr.bf16.mxu0 0
        %2452 = vmatpush1.bf16.msra.mxu0 0
        %2453 = vmatprep.subr.bf16.mxu0 0
        %2454 = vmatpush1.bf16.msra.mxu0 0
        %2455 = vmatprep.subr.bf16.mxu0 0
        %2456 = vmatpush1.bf16.msra.mxu0 0
        %2457 = vmatprep.subr.bf16.mxu0 0
        %2458 = vmatpush1.bf16.msra.mxu0 0
        %2459 = vmatprep.subr.bf16.mxu0 0
        %2460 = vmatpush1.bf16.msra.mxu0 0
        %2461 = vmatprep.subr.bf16.mxu0 0
        %2462 = vmatpush1.bf16.msra.mxu0 0
        %2463 = vmatprep.mubr.bf16.mxu0 0
        %2464 = vmatmul.mubr.bf16.gmra.mrb[0].mxu0 %v2408
        %v2465 = vpop.f32.mrb[0].mxu0
        %v2466 = vadd.f32 %v2390, %v2465
        %v2467 = vpop.f32.mrb[0].mxu0
        %v2468 = vadd.f32 %v2394, %v2467
        %v2469 = vpop.f32.mrb[0].mxu0
        %v2470 = vadd.f32 %v2390, %v2469
        %v2471 = vpop.f32.mrb[0].mxu0
        %v2472 = vadd.f32 %v2394, %v2471
        %2473 = vmatprep.mubr.bf16.mxu0 0
        %2474 = vmatmul.mubr.bf16.gmra.mrb[0].mxu0 %v2411
        %v2475 = vpop.f32.mrb[0].mxu0
        %v2476 = vadd.f32 %v2390, %v2475
        %v2477 = vpop.f32.mrb[0].mxu0
        %v2478 = vadd.f32 %v2394, %v2477
        %v2479 = vpop.f32.mrb[0].mxu0
        %v2480 = vadd.f32 %v2390, %v2479
        %v2481 = vpop.f32.mrb[0].mxu0
        %v2482 = vadd.f32 %v2394, %v2481
        %2483 = vmatprep.mubr.bf16.mxu0 0
        %2484 = vmatmul.mubr.bf16.gmra.mrb[0].mxu0 %v2414
        %v2485 = vpop.f32.mrb[0].mxu0
        %v2486 = vadd.f32 %v2390, %v2485
        %v2487 = vpop.f32.mrb[0].mxu0
        %v2488 = vadd.f32 %v2394, %v2487
        %v2489 = vpop.f32.mrb[0].mxu0
        %v2490 = vadd.f32 %v2390, %v2489
        %v2491 = vpop.f32.mrb[0].mxu0
        %v2492 = vadd.f32 %v2394, %v2491
        %2493 = vmatprep.mubr.bf16.mxu0 0
        %2494 = vmatmul.mubr.bf16.gmra.mrb[0].mxu0 %v2417
        %v2495 = vpop.f32.mrb[0].mxu0
        %v2496 = vadd.f32 %v2390, %v2495
        %v2497 = vpop.f32.mrb[0].mxu0
        %v2498 = vadd.f32 %v2394, %v2497
        %v2499 = vpop.f32.mrb[0].mxu0
        %v2500 = vadd.f32 %v2390, %v2499
        %v2501 = vpop.f32.mrb[0].mxu0
        %v2502 = vadd.f32 %v2394, %v2501
        %2503 = vmatprep.mubr.bf16.mxu0 0
        %2504 = vmatmul.mubr.bf16.gmra.mrb[0].mxu0 %v2420
        %v2505 = vpop.f32.mrb[0].mxu0
        %v2506 = vadd.f32 %v2390, %v2505
        %v2507 = vpop.f32.mrb[0].mxu0
        %v2508 = vadd.f32 %v2394, %v2507
        %v2509 = vpop.f32.mrb[0].mxu0
        %v2510 = vadd.f32 %v2390, %v2509
        %v2511 = vpop.f32.mrb[0].mxu0
        %v2512 = vadd.f32 %v2394, %v2511
        %2513 = vmatprep.mubr.bf16.mxu0 0
        %2514 = vmatmul.mubr.bf16.gmra.mrb[0].mxu0 %v2423
        %v2515 = vpop.f32.mrb[0].mxu0
        %v2516 = vadd.f32 %v2390, %v2515
        %v2517 = vpop.f32.mrb[0].mxu0
        %v2518 = vadd.f32 %v2394, %v2517
        %v2519 = vpop.f32.mrb[0].mxu0
        %v2520 = vadd.f32 %v2390, %v2519
        %v2521 = vpop.f32.mrb[0].mxu0
        %v2522 = vadd.f32 %v2394, %v2521
        %2523 = vmatprep.mubr.bf16.mxu0 0
        %2524 = vmatmul.mubr.bf16.gmra.mrb[0].mxu0 %v2426
        %v2525 = vpop.f32.mrb[0].mxu0
        %v2526 = vadd.f32 %v2390, %v2525
        %v2527 = vpop.f32.mrb[0].mxu0
        %v2528 = vadd.f32 %v2394, %v2527
        %v2529 = vpop.f32.mrb[0].mxu0
        %v2530 = vadd.f32 %v2390, %v2529
        %v2531 = vpop.f32.mrb[0].mxu0
        %v2532 = vadd.f32 %v2394, %v2531
        %2533 = vmatprep.mubr.bf16.mxu0 0
        %2534 = vmatmul.mubr.bf16.gmra.mrb[0].mxu0 %v2429
        %v2535 = vpop.f32.mrb[0].mxu0
        %v2536 = vadd.f32 %v2390, %v2535
        %v2537 = vpop.f32.mrb[0].mxu0
        %v2538 = vadd.f32 %v2394, %v2537
        %v2539 = vpop.f32.mrb[0].mxu0
        %v2540 = vadd.f32 %v2390, %v2539
        %v2541 = vpop.f32.mrb[0].mxu0
        %v2542 = vadd.f32 %v2394, %v2541
        %2543 = vdwg.mxu0
        %v2544 = vmax.f32 %v2466, %v2468
        %2545 = vmax.xlane.f32.xlu0 %v2544
        %v2546 = vpop.xlane.xlu0 %2545
        %v2547 = vmax.f32 %v2470, %v2472
        %2548 = vmax.xlane.f32.xlu0 %v2547
        %v2549 = vpop.xlane.xlu0 %2548
        %v2550 = vmax.f32 %v2476, %v2478
        %2551 = vmax.xlane.f32.xlu0 %v2550
        %v2552 = vpop.xlane.xlu0 %2551
        %v2553 = vmax.f32 %v2480, %v2482
        %2554 = vmax.xlane.f32.xlu0 %v2553
        %v2555 = vpop.xlane.xlu0 %2554
        %v2556 = vmax.f32 %v2486, %v2488
        %2557 = vmax.xlane.f32.xlu0 %v2556
        %v2558 = vpop.xlane.xlu0 %2557
        %v2559 = vmax.f32 %v2490, %v2492
        %2560 = vmax.xlane.f32.xlu0 %v2559
        %v2561 = vpop.xlane.xlu0 %2560
        %v2562 = vmax.f32 %v2496, %v2498
        %2563 = vmax.xlane.f32.xlu0 %v2562
        %v2564 = vpop.xlane.xlu0 %2563
        %v2565 = vmax.f32 %v2500, %v2502
        %2566 = vmax.xlane.f32.xlu0 %v2565
        %v2567 = vpop.xlane.xlu0 %2566
        %v2568 = vmax.f32 %v2506, %v2508
        %2569 = vmax.xlane.f32.xlu0 %v2568
        %v2570 = vpop.xlane.xlu0 %2569
        %v2571 = vmax.f32 %v2510, %v2512
        %2572 = vmax.xlane.f32.xlu0 %v2571
        %v2573 = vpop.xlane.xlu0 %2572
        %v2574 = vmax.f32 %v2516, %v2518
        %2575 = vmax.xlane.f32.xlu0 %v2574
        %v2576 = vpop.xlane.xlu0 %2575
        %v2577 = vmax.f32 %v2520, %v2522
        %2578 = vmax.xlane.f32.xlu0 %v2577
        %v2579 = vpop.xlane.xlu0 %2578
        %v2580 = vmax.f32 %v2526, %v2528
        %2581 = vmax.xlane.f32.xlu0 %v2580
        %v2582 = vpop.xlane.xlu0 %2581
        %v2583 = vmax.f32 %v2530, %v2532
        %2584 = vmax.xlane.f32.xlu0 %v2583
        %v2585 = vpop.xlane.xlu0 %2584
        %v2586 = vmax.f32 %v2536, %v2538
        %2587 = vmax.xlane.f32.xlu0 %v2586
        %v2588 = vpop.xlane.xlu0 %2587
        %v2589 = vmax.f32 %v2540, %v2542
        %2590 = vmax.xlane.f32.xlu0 %v2589
        %v2591 = vpop.xlane.xlu0 %2590
        %v2592 = vsub.f32 %v2466, %v2546
        %v2593 = vsub.f32 %v2468, %v2546
        %v2594 = vsub.f32 %v2470, %v2549
        %v2595 = vsub.f32 %v2472, %v2549
        %v2596 = vsub.f32 %v2476, %v2552
        %v2597 = vsub.f32 %v2478, %v2552
        %v2598 = vsub.f32 %v2480, %v2555
        %v2599 = vsub.f32 %v2482, %v2555
        %v2600 = vsub.f32 %v2486, %v2558
        %v2601 = vsub.f32 %v2488, %v2558
        %v2602 = vsub.f32 %v2490, %v2561
        %v2603 = vsub.f32 %v2492, %v2561
        %v2604 = vsub.f32 %v2496, %v2564
        %v2605 = vsub.f32 %v2498, %v2564
        %v2606 = vsub.f32 %v2500, %v2567
        %v2607 = vsub.f32 %v2502, %v2567
        %v2608 = vsub.f32 %v2506, %v2570
        %v2609 = vsub.f32 %v2508, %v2570
        %v2610 = vsub.f32 %v2510, %v2573
        %v2611 = vsub.f32 %v2512, %v2573
        %v2612 = vsub.f32 %v2516, %v2576
        %v2613 = vsub.f32 %v2518, %v2576
        %v2614 = vsub.f32 %v2520, %v2579
        %v2615 = vsub.f32 %v2522, %v2579
        %v2616 = vsub.f32 %v2526, %v2582
        %v2617 = vsub.f32 %v2528, %v2582
        %v2618 = vsub.f32 %v2530, %v2585
        %v2619 = vsub.f32 %v2532, %v2585
        %v2620 = vsub.f32 %v2536, %v2588
        %v2621 = vsub.f32 %v2538, %v2588
        %v2622 = vsub.f32 %v2540, %v2591
        %v2623 = vsub.f32 %v2542, %v2591
        %v2624 = vmul.f32 %v2592, 1.442695
        %v2625 = vpow.pop %v2624
        %v2626 = vmul.f32 %v2593, 1.442695
        %v2627 = vpow.pop %v2626
        %v2628 = vmul.f32 %v2594, 1.442695
        %v2629 = vpow.pop %v2628
        %v2630 = vmul.f32 %v2595, 1.442695
        %v2631 = vpow.pop %v2630
        %v2632 = vmul.f32 %v2596, 1.442695
        %v2633 = vpow.pop %v2632
        %v2634 = vmul.f32 %v2597, 1.442695
        %v2635 = vpow.pop %v2634
        %v2636 = vmul.f32 %v2598, 1.442695
        %v2637 = vpow.pop %v2636
        %v2638 = vmul.f32 %v2599, 1.442695
        %v2639 = vpow.pop %v2638
        %v2640 = vmul.f32 %v2600, 1.442695
        %v2641 = vpow.pop %v2640
        %v2642 = vmul.f32 %v2601, 1.442695
        %v2643 = vpow.pop %v2642
        %v2644 = vmul.f32 %v2602, 1.442695
        %v2645 = vpow.pop %v2644
        %v2646 = vmul.f32 %v2603, 1.442695
        %v2647 = vpow.pop %v2646
        %v2648 = vmul.f32 %v2604, 1.442695
        %v2649 = vpow.pop %v2648
        %v2650 = vmul.f32 %v2605, 1.442695
        %v2651 = vpow.pop %v2650
        %v2652 = vmul.f32 %v2606, 1.442695
        %v2653 = vpow.pop %v2652
        %v2654 = vmul.f32 %v2607, 1.442695
        %v2655 = vpow.pop %v2654
        %v2656 = vmul.f32 %v2608, 1.442695
        %v2657 = vpow.pop %v2656
        %v2658 = vmul.f32 %v2609, 1.442695
        %v2659 = vpow.pop %v2658
        %v2660 = vmul.f32 %v2610, 1.442695
        %v2661 = vpow.pop %v2660
        %v2662 = vmul.f32 %v2611, 1.442695
        %v2663 = vpow.pop %v2662
        %v2664 = vmul.f32 %v2612, 1.442695
        %v2665 = vpow.pop %v2664
        %v2666 = vmul.f32 %v2613, 1.442695
        %v2667 = vpow.pop %v2666
        %v2668 = vmul.f32 %v2614, 1.442695
        %v2669 = vpow.pop %v2668
        %v2670 = vmul.f32 %v2615, 1.442695
        %v2671 = vpow.pop %v2670
        %v2672 = vmul.f32 %v2616, 1.442695
        %v2673 = vpow.pop %v2672
        %v2674 = vmul.f32 %v2617, 1.442695
        %v2675 = vpow.pop %v2674
        %v2676 = vmul.f32 %v2618, 1.442695
        %v2677 = vpow.pop %v2676
        %v2678 = vmul.f32 %v2619, 1.442695
        %v2679 = vpow.pop %v2678
        %v2680 = vmul.f32 %v2620, 1.442695
        %v2681 = vpow.pop %v2680
        %v2682 = vmul.f32 %v2621, 1.442695
        %v2683 = vpow.pop %v2682
        %v2684 = vmul.f32 %v2622, 1.442695
        %v2685 = vpow.pop %v2684
        %v2686 = vmul.f32 %v2623, 1.442695
        %v2687 = vpow.pop %v2686
        %v2688 = vadd.f32 %v2625, %v2627
        %2689 = vadd.xlane.f32.xlu0 %v2688
        %v2690 = vpop.xlane.xlu0 %2689
        %v2691 = vadd.f32 %v2629, %v2631
        %2692 = vadd.xlane.f32.xlu0 %v2691
        %v2693 = vpop.xlane.xlu0 %2692
        %v2694 = vadd.f32 %v2633, %v2635
        %2695 = vadd.xlane.f32.xlu0 %v2694
        %v2696 = vpop.xlane.xlu0 %2695
        %v2697 = vadd.f32 %v2637, %v2639
        %2698 = vadd.xlane.f32.xlu0 %v2697
        %v2699 = vpop.xlane.xlu0 %2698
        %v2700 = vadd.f32 %v2641, %v2643
        %2701 = vadd.xlane.f32.xlu0 %v2700
        %v2702 = vpop.xlane.xlu0 %2701
        %v2703 = vadd.f32 %v2645, %v2647
        %2704 = vadd.xlane.f32.xlu0 %v2703
        %v2705 = vpop.xlane.xlu0 %2704
        %v2706 = vadd.f32 %v2649, %v2651
        %2707 = vadd.xlane.f32.xlu0 %v2706
        %v2708 = vpop.xlane.xlu0 %2707
        %v2709 = vadd.f32 %v2653, %v2655
        %2710 = vadd.xlane.f32.xlu0 %v2709
        %v2711 = vpop.xlane.xlu0 %2710
        %v2712 = vadd.f32 %v2657, %v2659
        %2713 = vadd.xlane.f32.xlu0 %v2712
        %v2714 = vpop.xlane.xlu0 %2713
        %v2715 = vadd.f32 %v2661, %v2663
        %2716 = vadd.xlane.f32.xlu0 %v2715
        %v2717 = vpop.xlane.xlu0 %2716
        %v2718 = vadd.f32 %v2665, %v2667
        %2719 = vadd.xlane.f32.xlu0 %v2718
        %v2720 = vpop.xlane.xlu0 %2719
        %v2721 = vadd.f32 %v2669, %v2671
        %2722 = vadd.xlane.f32.xlu0 %v2721
        %v2723 = vpop.xlane.xlu0 %2722
        %v2724 = vadd.f32 %v2673, %v2675
        %2725 = vadd.xlane.f32.xlu0 %v2724
        %v2726 = vpop.xlane.xlu0 %2725
        %v2727 = vadd.f32 %v2677, %v2679
        %2728 = vadd.xlane.f32.xlu0 %v2727
        %v2729 = vpop.xlane.xlu0 %2728
        %v2730 = vadd.f32 %v2681, %v2683
        %2731 = vadd.xlane.f32.xlu0 %v2730
        %v2732 = vpop.xlane.xlu0 %2731
        %v2733 = vadd.f32 %v2685, %v2687
        %2734 = vadd.xlane.f32.xlu0 %v2733
        %v2735 = vpop.xlane.xlu0 %2734
        %v2736 = vlog2.pop %v2690
        %v2737 = vmul.f32 %v2736, 0.6931472
        %v2738 = vlog2.pop %v2693
        %v2739 = vmul.f32 %v2738, 0.6931472
        %v2740 = vlog2.pop %v2696
        %v2741 = vmul.f32 %v2740, 0.6931472
        %v2742 = vlog2.pop %v2699
        %v2743 = vmul.f32 %v2742, 0.6931472
        %v2744 = vlog2.pop %v2702
        %v2745 = vmul.f32 %v2744, 0.6931472
        %v2746 = vlog2.pop %v2705
        %v2747 = vmul.f32 %v2746, 0.6931472
        %v2748 = vlog2.pop %v2708
        %v2749 = vmul.f32 %v2748, 0.6931472
        %v2750 = vlog2.pop %v2711
        %v2751 = vmul.f32 %v2750, 0.6931472
        %v2752 = vlog2.pop %v2714
        %v2753 = vmul.f32 %v2752, 0.6931472
        %v2754 = vlog2.pop %v2717
        %v2755 = vmul.f32 %v2754, 0.6931472
        %v2756 = vlog2.pop %v2720
        %v2757 = vmul.f32 %v2756, 0.6931472
        %v2758 = vlog2.pop %v2723
        %v2759 = vmul.f32 %v2758, 0.6931472
        %v2760 = vlog2.pop %v2726
        %v2761 = vmul.f32 %v2760, 0.6931472
        %v2762 = vlog2.pop %v2729
        %v2763 = vmul.f32 %v2762, 0.6931472
        %v2764 = vlog2.pop %v2732
        %v2765 = vmul.f32 %v2764, 0.6931472
        %v2766 = vlog2.pop %v2735
        %v2767 = vmul.f32 %v2766, 0.6931472
        %v2768 = vadd.f32 %v2737, %v2546
        %v2769 = vadd.f32 %v2739, %v2549
        %v2770 = vadd.f32 %v2741, %v2552
        %v2771 = vadd.f32 %v2743, %v2555
        %v2772 = vadd.f32 %v2745, %v2558
        %v2773 = vadd.f32 %v2747, %v2561
        %v2774 = vadd.f32 %v2749, %v2564
        %v2775 = vadd.f32 %v2751, %v2567
        %v2776 = vadd.f32 %v2753, %v2570
        %v2777 = vadd.f32 %v2755, %v2573
        %v2778 = vadd.f32 %v2757, %v2576
        %v2779 = vadd.f32 %v2759, %v2579
        %v2780 = vadd.f32 %v2761, %v2582
        %v2781 = vadd.f32 %v2763, %v2585
        %v2782 = vadd.f32 %v2765, %v2588
        %v2783 = vadd.f32 %v2767, %v2591
        %v2784 = vsub.f32 %v2466, %v2768
        %v2785 = vsub.f32 %v2468, %v2768
        %v2786 = vsub.f32 %v2470, %v2769
        %v2787 = vsub.f32 %v2472, %v2769
        %v2788 = vsub.f32 %v2476, %v2770
        %v2789 = vsub.f32 %v2478, %v2770
        %v2790 = vsub.f32 %v2480, %v2771
        %v2791 = vsub.f32 %v2482, %v2771
        %v2792 = vsub.f32 %v2486, %v2772
        %v2793 = vsub.f32 %v2488, %v2772
        %v2794 = vsub.f32 %v2490, %v2773
        %v2795 = vsub.f32 %v2492, %v2773
        %v2796 = vsub.f32 %v2496, %v2774
        %v2797 = vsub.f32 %v2498, %v2774
        %v2798 = vsub.f32 %v2500, %v2775
        %v2799 = vsub.f32 %v2502, %v2775
        %v2800 = vsub.f32 %v2506, %v2776
        %v2801 = vsub.f32 %v2508, %v2776
        %v2802 = vsub.f32 %v2510, %v2777
        %v2803 = vsub.f32 %v2512, %v2777
        %v2804 = vsub.f32 %v2516, %v2778
        %v2805 = vsub.f32 %v2518, %v2778
        %v2806 = vsub.f32 %v2520, %v2779
        %v2807 = vsub.f32 %v2522, %v2779
        %v2808 = vsub.f32 %v2526, %v2780
        %v2809 = vsub.f32 %v2528, %v2780
        %v2810 = vsub.f32 %v2530, %v2781
        %v2811 = vsub.f32 %v2532, %v2781
        %v2812 = vsub.f32 %v2536, %v2782
        %v2813 = vsub.f32 %v2538, %v2782
        %v2814 = vsub.f32 %v2540, %v2783
        %v2815 = vsub.f32 %v2542, %v2783
        %2816 = vst [vmem:[%s476] sm:$0xff] %v2784
        %2817 = vst [vmem:[%s476 + $0x8] sm:$0xff] %v2785
        %2818 = vst [vmem:[%s476 + $0x10] sm:$0xff] %v2786
        %2819 = vst [vmem:[%s476 + $0x18] sm:$0xff] %v2787
        %2820 = vst [vmem:[%s476 + $0x20] sm:$0xff] %v2788
        %2821 = vst [vmem:[%s476 + $0x28] sm:$0xff] %v2789
        %2822 = vst [vmem:[%s476 + $0x30] sm:$0xff] %v2790
        %2823 = vst [vmem:[%s476 + $0x38] sm:$0xff] %v2791
        %2824 = vst [vmem:[%s476 + $0x40] sm:$0xff] %v2792
        %2825 = vst [vmem:[%s476 + $0x48] sm:$0xff] %v2793
        %2826 = vst [vmem:[%s476 + $0x50] sm:$0xff] %v2794
        %2827 = vst [vmem:[%s476 + $0x58] sm:$0xff] %v2795
        %2828 = vst [vmem:[%s476 + $0x60] sm:$0xff] %v2796
        %2829 = vst [vmem:[%s476 + $0x68] sm:$0xff] %v2797
        %2830 = vst [vmem:[%s476 + $0x70] sm:$0xff] %v2798
        %2831 = vst [vmem:[%s476 + $0x78] sm:$0xff] %v2799
        %2832 = vst [vmem:[%s476 + $0x80] sm:$0xff] %v2800
        %2833 = vst [vmem:[%s476 + $0x88] sm:$0xff] %v2801
        %2834 = vst [vmem:[%s476 + $0x90] sm:$0xff] %v2802
        %2835 = vst [vmem:[%s476 + $0x98] sm:$0xff] %v2803
        %2836 = vst [vmem:[%s476 + $0xa0] sm:$0xff] %v2804
        %2837 = vst [vmem:[%s476 + $0xa8] sm:$0xff] %v2805
        %2838 = vst [vmem:[%s476 + $0xb0] sm:$0xff] %v2806
        %2839 = vst [vmem:[%s476 + $0xb8] sm:$0xff] %v2807
        %2840 = vst [vmem:[%s476 + $0xc0] sm:$0xff] %v2808
        %2841 = vst [vmem:[%s476 + $0xc8] sm:$0xff] %v2809
        %2842 = vst [vmem:[%s476 + $0xd0] sm:$0xff] %v2810
        %2843 = vst [vmem:[%s476 + $0xd8] sm:$0xff] %v2811
        %2844 = vst [vmem:[%s476 + $0xe0] sm:$0xff] %v2812
        %2845 = vst [vmem:[%s476 + $0xe8] sm:$0xff] %v2813
        %2846 = vst [vmem:[%s476 + $0xf0] sm:$0xff] %v2814
        %2847 = vst [vmem:[%s476 + $0xf8] sm:$0xff] %v2815
        %s2848 = sand.u32 %s222, 1
        %s2849 = scalar_lea.sflag [#allocation4], %s2848
        %s2850 = sand.u32 %s222, 1
        %s2851 = smul.addr %s2850, 256
        %s2852 = scalar_lea.vmem [#allocation16], %s2851
        %s2853 = sand.u32 %s248, 1
        %s2854 = scalar_lea.sflag [#allocation18], %s2853
        %s2855 = sand.u32 %s248, 1
        %s2856 = smul.addr %s2855, 128
        %s2857 = scalar_lea.vmem [#allocation17], %s2856
        // Predicated region
        $region85: #{tpu_custom_call.1} parent=51 // pred_check
          %p2858 = pneg %p232
        $region86: #{tpu_custom_call.1} parent=51 // pred_check_branch
          %2860 = sbr.rel (%p2858) target = $region88
        $region87: #{tpu_custom_call.1} parent=51 // pred_region
          %s2861 = smul.u32 16, %s36
          %s2863 = ssub.s32 4096, 4096
          %2864 = vsyncadd %s2849, %s2863
          %s2865 = smul.addr %s2861, 2
          %s2866 = smul.addr %s2865, 128
          %s2867 = scalar_lea.hbm %s8, %s2866
          %s2868 = sshll.u32 %s2852, 4
          %s2869 = int_to_ptr.vmem [resolvable:$true] %s2868
          %2874 = dma.vmem_to_hbm [thread:$0]  %s2869, 4096, %s2867, %s2849, 256, 256, 16
        $region88: #{tpu_custom_call.1} parent=51 // pred_fallthru
          _
        // Predicated region
        $region89: #{tpu_custom_call.1} parent=51 // pred_check
          %p2875 = pneg %p258
        $region90: #{tpu_custom_call.1} parent=51 // pred_check_branch
          %2877 = sbr.rel (%p2875) target = $region92
        $region91: #{tpu_custom_call.1} parent=51 // pred_region
          %s2878 = smul.u32 16, %s36
          %s2880 = ssub.s32 2048, 2048
          %2881 = vsyncadd %s2854, %s2880
          %s2882 = smul.addr %s2878, 128
          %s2883 = scalar_lea.hbm %s9, %s2882
          %s2884 = sshll.u32 %s2857, 4
          %s2885 = int_to_ptr.vmem [resolvable:$true] %s2884
          %2890 = dma.vmem_to_hbm [thread:$0]  %s2885, 2048, %s2883, %s2854, 128, 128, 8
        $region92: #{tpu_custom_call.1} parent=51 // pred_fallthru
          _
      $region52: #{tpu_custom_call.1} parent=5 // pred_fallthru
        _
      %p2891 = scmp.le.s32.totalorder 2, %s31
      // Predicated region
      $region93: #{tpu_custom_call.1} parent=5 // pred_check
        %p2892 = pneg %p2891
      $region94: #{tpu_custom_call.1} parent=5 // pred_check_branch
        %2894 = sbr.rel (%p2892) target = $region96
      $region95: #{tpu_custom_call.1} parent=5 // pred_region
        %s2895 = ssub.s32 %s31, 2
        // Predicated region
        $region97: #{tpu_custom_call.1} parent=95 // pred_check
          %p2896 = pneg %p238
        $region98: #{tpu_custom_call.1} parent=95 // pred_check_branch
          %2898 = sbr.rel (%p2896) target = $region100
        $region99: #{tpu_custom_call.1} parent=95 // pred_region
          %s2899 = sand.u32 %s223, 1
          %s2900 = scalar_lea.sflag [#allocation4], %s2899
          %s2901 = sand.u32 %s223, 1
          %s2902 = smul.addr %s2901, 256
          %s2903 = scalar_lea.vmem [#allocation16], %s2902
          %2904 = dma.done %s2900, 4096
        $region100: #{tpu_custom_call.1} parent=95 // pred_fallthru
          _
        // Predicated region
        $region101: #{tpu_custom_call.1} parent=95 // pred_check
          %p2905 = pneg %p264
        $region102: #{tpu_custom_call.1} parent=95 // pred_check_branch
          %2907 = sbr.rel (%p2905) target = $region104
        $region103: #{tpu_custom_call.1} parent=95 // pred_region
          %s2908 = sand.u32 %s249, 1
          %s2909 = scalar_lea.sflag [#allocation18], %s2908
          %s2910 = sand.u32 %s249, 1
          %s2911 = smul.addr %s2910, 128
          %s2912 = scalar_lea.vmem [#allocation17], %s2911
          %2913 = dma.done %s2909, 2048
        $region104: #{tpu_custom_call.1} parent=95 // pred_fallthru
          _
      $region96: #{tpu_custom_call.1} parent=5 // pred_fallthru
        _
    $region6: #{tpu_custom_call.1} parent=1 // loop_footer
      %s35 = sadd.s32 1, %s31
    $region7: #{tpu_custom_call.1} parent=1 // loop_footer_branch
      %30 = sbr.rel target = $region3
    $region8: #{tpu_custom_call.1} parent=1 // loop_exit
      _
    %2914 = vsyncpa [#allocation3], 1
    %s2915 = scalar_lea.sflag [#allocation3], 1
    %2916 = vsyncpa %s2915, 1
    %2917 = vsyncpa [#allocation6], 1
    %2918 = vsyncpa [#allocation9], 1
    %2919 = vsyncpa [#allocation12], 1
    %s2920 = scalar_lea.sflag [#allocation12], 1
    %2921 = vsyncpa %s2920, 1
    %2922 = vsyncpa [#allocation15], 1
    %2923 = vsyncpa [#allocation4], 1
    %s2924 = scalar_lea.sflag [#allocation4], 1
    %2925 = vsyncpa %s2924, 1
    %2926 = vsyncpa [#allocation18], 1
    %s2927 = scalar_lea.sflag [#allocation18], 1
    %2928 = vsyncpa %s2927, 1

</llo_original>
